<compile_context>
chip_gen: v5e
topology: v5e:2x2
jax: 0.10.0
libtpu: 0.0.40
codegen_flags: <defaults>
</compile_context>

<pallas_src>
import functools

import numpy as np
import jax
import jax.numpy as jnp
from jax import lax
from jax.experimental import pallas as pl
from jax.experimental.pallas import tpu as pltpu

LANES = 128   # lane-dense channel padding for every weight / activation


def _round_up(x, m):
    return (x + m - 1) // m * m


# --------------------------------------------------------------------------- #
# Fused kernel: conv1+pool+relu -> conv2+pool2+relu -> conv3+pool2+relu        #
# --------------------------------------------------------------------------- #
def _fused_cnn_kernel(p1_ref, g2_ref, g3_ref, w1_ref, w2_ref, w3_ref, b_ref,
                      o_ref, *, TB, NP1, NP2, NP3, T2, R2, T3, R3, KG2, KG3):
    f32, bf16 = jnp.float32, jnp.bfloat16

    def pad_rows(v, rows):            # zero-pad the contraction dim of a gather dot
        if v.shape[0] == rows:
            return v
        return jnp.concatenate(
            [v, jnp.zeros((rows - v.shape[0], v.shape[1]), v.dtype)], axis=0)

    def max4(z0, z1, z2, z3):         # max over the 4 pool-window members
        return jnp.maximum(jnp.maximum(z0, z1), jnp.maximum(z2, z3))

    # ---- layer 1: ONE MXU dot over all 4 pool members, member max, bias, relu
    y1 = jnp.dot(p1_ref[...], w1_ref[...], preferred_element_type=f32)
    z = y1.reshape(TB, 4, NP1, LANES)
    y1 = max4(z[:, 0], z[:, 1], z[:, 2], z[:, 3]).reshape(TB * NP1, LANES)
    a1 = jnp.maximum(y1 + b_ref[0], 0.0).astype(bf16)            # [TB*NP1, 128]

    # ---- layer 2: in-kernel im2col (one-hot gather dot) + ONE conv dot ----
    t2 = jnp.dot(g2_ref[...], pad_rows(a1, KG2),
                 preferred_element_type=f32).astype(bf16)        # [T2*R2, 128]
    lhs2 = jnp.concatenate([t2[i * R2:(i + 1) * R2] for i in range(T2)], axis=1)
    y2 = jnp.dot(lhs2, w2_ref[...], preferred_element_type=f32)  # [R2, 128]
    z = y2.reshape(4, TB * NP2, LANES)
    a2 = jnp.maximum(max4(z[0], z[1], z[2], z[3]) + b_ref[1], 0.0).astype(bf16)

    # ---- layer 3: same pattern ----
    t3 = jnp.dot(g3_ref[...], pad_rows(a2, KG3),
                 preferred_element_type=f32).astype(bf16)        # [T3*R3, 128]
    lhs3 = jnp.concatenate([t3[i * R3:(i + 1) * R3] for i in range(T3)], axis=1)
    y3 = jnp.dot(lhs3, w3_ref[...], preferred_element_type=f32)  # [R3, 128]
    z = y3.reshape(4, TB * NP3, LANES)
    o_ref[...] = jnp.maximum(max4(z[0], z[1], z[2], z[3]) + b_ref[2], 0.0)


# --------------------------------------------------------------------------- #
# Glue helpers                                                                 #
# --------------------------------------------------------------------------- #
def _conv1_patches(xp, OH, OW, K, S):
    """im2col for conv1 (single input channel).  xp: [B, Hp, Wp] zero-padded.
    Returns [B, OH, OW, K*K] patches with features ordered (kh, kw)."""
    B, Hp, Wp = xp.shape
    trick = (K == 2 * S and Hp % S == 0 and Wp % S == 0
             and OH == Hp // S - 1 and OW == Wp // S - 1)
    if trick:
        # stride-phase reshape trick: a handful of HLOs instead of K*K slices
        g = xp.reshape(B, Hp // S, S, Wp // S, S)
        slabs = [g[:, dr:dr + OH, :, dc:dc + OW, :]
                 for dr in (0, 1) for dc in (0, 1)]
        p = jnp.stack(slabs, axis=0).reshape(2, 2, B, OH, S, OW, S)
        return p.transpose(2, 3, 5, 0, 4, 1, 6).reshape(B, OH, OW, K * K)
    cols = [lax.slice(xp, (0, kh, kw),
                      (B, kh + S * (OH - 1) + 1, kw + S * (OW - 1) + 1),
                      (1, S, S))
            for kh in range(K) for kw in range(K)]
    return jnp.stack(cols, axis=-1)


def _gather_matrix(TB, HIN, WIN, K, S, PAD, PPAD):
    """Constant one-hot matrix mapping the flat [TB*HIN*WIN, C] activation of a
    batch tile to the rows needed for Conv2d(K, S, PAD) + MaxPool2d(2, 2, PPAD).
    Output rows ordered (tap, pool-member, tb, ph, pw).  Conv zero-padding ->
    all-zero rows; pool padding -> the member duplicates a valid member of the
    same pool window (duplicates never change the max -> no mask needed)."""
    OH = (HIN + 2 * PAD - K) // S + 1
    OW = (WIN + 2 * PAD - K) // S + 1
    PH = (OH + 2 * PPAD - 2) // 2 + 1
    PW = (OW + 2 * PPAD - 2) // 2 + 1
    T, NP = K * K, PH * PW
    R = 4 * TB * NP
    cols = _round_up(TB * HIN * WIN, LANES)         # pad contraction dim to 128
    G = np.zeros((T * R, cols), np.float32)
    for kh in range(K):
        for kw in range(K):
            t = kh * K + kw
            for q in range(4):
                qr, qc = divmod(q, 2)
                for tb in range(TB):
                    for ph in range(PH):
                        for pw in range(PW):
                            r = ((q * TB + tb) * PH + ph) * PW + pw
                            oh = min(max(2 * ph - PPAD + qr, 0), OH - 1)
                            ow = min(max(2 * pw - PPAD + qc, 0), OW - 1)
                            ih = oh * S - PAD + kh
                            iw = ow * S - PAD + kw
                            if 0 <= ih < HIN and 0 <= iw < WIN:
                                G[t * R + r, (tb * HIN + ih) * WIN + iw] = 1.0
    return jnp.asarray(G, jnp.bfloat16), PH, PW


# --------------------------------------------------------------------------- #
# Params                                                                       #
# --------------------------------------------------------------------------- #
def init_params(key):
    """Deterministic synthetic init matching the PyTorch Conv2d shapes."""
    def conv_init(k, cout, cin, kh, kw):
        kw_, kb_ = jax.random.split(k)
        fan_in = cin * kh * kw
        bound = 1.0 / jnp.sqrt(fan_in)
        w = jax.random.uniform(kw_, (cout, cin, kh, kw), jnp.float32, -bound, bound)
        b = jax.random.uniform(kb_, (cout,), jnp.float32, -bound, bound)
        return w, b

    k1, k2, k3 = jax.random.split(key, 3)
    w1, b1 = conv_init(k1, 32, 1, 8, 8)    # Conv2d(1, 32, 8, 4, 2)
    w2, b2 = conv_init(k2, 64, 32, 4, 4)   # Conv2d(32, 64, 4, 2, 1)
    w3, b3 = conv_init(k3, 64, 64, 3, 3)   # Conv2d(64, 64, 3, 1, 1)
    return dict(w1=w1, b1=b1, w2=w2, b2=b2, w3=w3, b3=b3)


def pack_params(params):
    """One-time packing of torch-layout conv weights into the lane-dense,
    im2col-ordered bf16 matrices the fused kernel consumes (call outside jit)."""
    def conv_matrix(w, kpad):
        cout, cin, KH, KW = w.shape
        m = jnp.transpose(w, (2, 3, 1, 0))                        # (kh, kw, cin, cout)
        m = jnp.pad(m, ((0, 0), (0, 0), (0, kpad - cin), (0, LANES - cout)))
        return m.reshape(KH * KW * kpad, LANES).astype(jnp.bfloat16)

    def bias_row(b):
        return jnp.pad(b.astype(jnp.float32), (0, LANES - b.shape[0]))

    w1 = conv_matrix(params["w1"], kpad=1)                        # [64, 128]
    w1 = jnp.pad(w1, ((0, LANES - w1.shape[0]), (0, 0)))          # K1: 64 -> 128
    w2 = conv_matrix(params["w2"], kpad=LANES)                    # [16*128, 128]
    w3 = conv_matrix(params["w3"], kpad=LANES)                    # [ 9*128, 128]
    b = jnp.stack([bias_row(params["b1"]), bias_row(params["b2"]),
                   bias_row(params["b3"])])[:, None, :]           # [3, 1, 128]
    return dict(w1=w1, w2=w2, w3=w3, b=b)


# --------------------------------------------------------------------------- #
# Forward pass                                                                 #
# --------------------------------------------------------------------------- #
def cnn_forward(x, packed):
    """relu(pool(conv1)) -> relu(pool2(conv2)) -> relu(pool2(conv3)) -> flatten,
    as a single fused Pallas kernel."""
    B, C, H, W = x.shape
    assert C == 1, "Cnn.conv1 expects a single input channel"

    # Batch tiling: bigger tiles amortize the per-grid-step overhead; larger
    # batches get >= 2 parallel steps so v7x's second TensorCore is used.
    if B >= 32:
        TB = 8
    elif B >= 8:
        TB = 4
    else:
        TB = 2
    B_pad = _round_up(B, TB)
    if B_pad != B:
        x = jnp.pad(x, ((0, B_pad - B), (0, 0), (0, 0), (0, 0)))

    # ---- layer-1 geometry: Conv2d(1,32,8,4,2) + MaxPool2d(2) ----
    K1, S1, P1 = 8, 4, 2
    OH1 = (H + 2 * P1 - K1) // S1 + 1
    OW1 = (W + 2 * P1 - K1) // S1 + 1
    PH1, PW1 = OH1 // 2, OW1 // 2                        # floor pooling, pad 0
    NP1 = PH1 * PW1

    # ---- glue: layer-1 im2col + pool-member grouping (bf16, K padded to 128) ----
    xp = jnp.pad(x[:, 0].astype(jnp.bfloat16), ((0, 0), (P1, P1), (P1, P1)))
    pat = _conv1_patches(xp, OH1, OW1, K1, S1)           # [B, OH1, OW1, 64]
    pat = pat[:, :2 * PH1, :2 * PW1]                     # crop odd edge (floor pool)
    pat = pat.reshape(B_pad, PH1, 2, PW1, 2, K1 * K1).transpose(0, 2, 4, 1, 3, 5)
    p1 = pat.reshape(B_pad, 4 * NP1, K1 * K1)            # rows: (member, ph, pw)
    p1 = jnp.pad(p1, ((0, 0), (0, 0), (0, LANES - K1 * K1)))
    p1 = p1.reshape(B_pad * 4 * NP1, LANES)

    # ---- trace-time constant gather matrices for the in-kernel layers 2 & 3 ----
    g2, PH2, PW2 = _gather_matrix(TB, PH1, PW1, K=4, S=2, PAD=1, PPAD=1)
    g3, PH3, PW3 = _gather_matrix(TB, PH2, PW2, K=3, S=1, PAD=1, PPAD=1)
    NP2, NP3 = PH2 * PW2, PH3 * PW3
    T2, R2 = 16, 4 * TB * NP2
    T3, R3 = 9, 4 * TB * NP3

    kernel = functools.partial(
        _fused_cnn_kernel, TB=TB, NP1=NP1, NP2=NP2, NP3=NP3,
        T2=T2, R2=R2, T3=T3, R3=R3, KG2=g2.shape[1], KG3=g3.shape[1])

    resident = lambda a: pl.BlockSpec(a.shape, lambda *_: (0,) * a.ndim)
    out = pl.pallas_call(
        kernel,
        out_shape=jax.ShapeDtypeStruct((B_pad * NP3, LANES), jnp.float32),
        grid=(B_pad // TB,),
        in_specs=[
            pl.BlockSpec((TB * 4 * NP1, LANES), lambda i: (i, 0)),  # layer-1 patches
            resident(g2), resident(g3),                             # gather matrices
            resident(packed["w1"]), resident(packed["w2"]), resident(packed["w3"]),
            resident(packed["b"]),
        ],
        out_specs=pl.BlockSpec((TB * NP3, LANES), lambda i: (i, 0)),
        compiler_params=pltpu.CompilerParams(
            dimension_semantics=("parallel",)),
    )(p1, g2, g3, packed["w1"], packed["w2"], packed["w3"], packed["b"])

    # ---- glue: drop batch / lane padding, flatten in torch NCHW order ----
    feat = out[:B * NP3].reshape(B, PH3, PW3, LANES)[..., :64]   # conv3: 64 channels
    return jnp.transpose(feat, (0, 3, 1, 2)).reshape(B, -1)


if __name__ == "__main__":
    key = jax.random.PRNGKey(0)
    kparams, kx = jax.random.split(key)
    params = init_params(kparams)
    packed = pack_params(params)           # one-time weight packing (outside jit)

    # small input consistent with Conv2d(1, ...): batch=2, 1 channel, 32x32
    x = jax.random.normal(kx, (2, 1, 32, 32), dtype=jnp.float32)

    out = jax.jit(cnn_forward)(x, packed)
    jax.block_until_ready(out)

    # 32x32 -> conv1 8x8 -> pool 4x4 -> conv2 2x2 -> pool 2x2 -> conv3 2x2 -> pool 2x2
    assert out.shape == (2, 64 * 2 * 2), out.shape
    assert out.dtype == jnp.float32
    print("KERNEL_OK")
</pallas_src>

<mosaic_0001>
module attributes {stable_mosaic.version = 11 : i64} {
  func.func @_fused_cnn_kernel(%arg0: i32, %arg1: memref<128x128xbf16, #tpu.memory_space<vmem>>, %arg2: memref<512x128xbf16, #tpu.memory_space<vmem>>, %arg3: memref<288x128xbf16, #tpu.memory_space<vmem>>, %arg4: memref<128x128xbf16, #tpu.memory_space<vmem>>, %arg5: memref<2048x128xbf16, #tpu.memory_space<vmem>>, %arg6: memref<1152x128xbf16, #tpu.memory_space<vmem>>, %arg7: memref<3x1x128xf32, #tpu.memory_space<vmem>>, %arg8: memref<8x128xf32, #tpu.memory_space<vmem>>) attributes {dimension_semantics = [#tpu.dimension_semantics<parallel>], iteration_bounds = array<i64: 1>, scalar_prefetch = 0 : i64, scratch_operands = 0 : i64, tpu.core_type = #tpu.core_type<tc>, window_params = [{transform_indices = @transform_0, window_bounds = array<i64: 128, 128>}, {pipeline_mode = #tpu.pipeline_mode<synchronous>, transform_indices = @transform_1, window_bounds = array<i64: 512, 128>}, {pipeline_mode = #tpu.pipeline_mode<synchronous>, transform_indices = @transform_2, window_bounds = array<i64: 288, 128>}, {pipeline_mode = #tpu.pipeline_mode<synchronous>, transform_indices = @transform_3, window_bounds = array<i64: 128, 128>}, {pipeline_mode = #tpu.pipeline_mode<synchronous>, transform_indices = @transform_4, window_bounds = array<i64: 2048, 128>}, {pipeline_mode = #tpu.pipeline_mode<synchronous>, transform_indices = @transform_5, window_bounds = array<i64: 1152, 128>}, {pipeline_mode = #tpu.pipeline_mode<synchronous>, transform_indices = @transform_6, window_bounds = array<i64: 3, 1, 128>}, {transform_indices = @transform_7, window_bounds = array<i64: 8, 128>}]} {
    %c0 = arith.constant 0 : index
    %c0_0 = arith.constant 0 : index
    %0 = vector.load %arg1[%c0, %c0_0] : memref<128x128xbf16, #tpu.memory_space<vmem>>, vector<128x128xbf16>
    %c0_1 = arith.constant 0 : index
    %c0_2 = arith.constant 0 : index
    %1 = vector.load %arg4[%c0_1, %c0_2] : memref<128x128xbf16, #tpu.memory_space<vmem>>, vector<128x128xbf16>
    %cst = arith.constant dense<0.000000e+00> : vector<128x128xf32>
    %2 = tpu.matmul %0, %1, %cst {dimension_numbers = #tpu.dot_dimension_numbers<[1], [0], [0], [1], [0, 0, 1, 1], [], []>} : vector<128x128xbf16>, vector<128x128xbf16>, vector<128x128xf32> -> vector<128x128xf32>
    %3 = vector.shape_cast %2 : vector<128x128xf32> to vector<2x4x16x128xf32>
    %4 = vector.extract_strided_slice %3 {offsets = [0, 0, 0, 0], sizes = [2, 1, 16, 128], strides = [1, 1, 1, 1]} : vector<2x4x16x128xf32> to vector<2x1x16x128xf32>
    %5 = vector.shape_cast %4 : vector<2x1x16x128xf32> to vector<2x16x128xf32>
    %6 = vector.extract_strided_slice %3 {offsets = [0, 1, 0, 0], sizes = [2, 1, 16, 128], strides = [1, 1, 1, 1]} : vector<2x4x16x128xf32> to vector<2x1x16x128xf32>
    %7 = vector.shape_cast %6 : vector<2x1x16x128xf32> to vector<2x16x128xf32>
    %8 = vector.extract_strided_slice %3 {offsets = [0, 2, 0, 0], sizes = [2, 1, 16, 128], strides = [1, 1, 1, 1]} : vector<2x4x16x128xf32> to vector<2x1x16x128xf32>
    %9 = vector.shape_cast %8 : vector<2x1x16x128xf32> to vector<2x16x128xf32>
    %10 = vector.extract_strided_slice %3 {offsets = [0, 3, 0, 0], sizes = [2, 1, 16, 128], strides = [1, 1, 1, 1]} : vector<2x4x16x128xf32> to vector<2x1x16x128xf32>
    %11 = vector.shape_cast %10 : vector<2x1x16x128xf32> to vector<2x16x128xf32>
    %12 = arith.maximumf %5, %7 : vector<2x16x128xf32>
    %13 = arith.maximumf %9, %11 : vector<2x16x128xf32>
    %14 = arith.maximumf %12, %13 : vector<2x16x128xf32>
    %15 = vector.shape_cast %14 : vector<2x16x128xf32> to vector<32x128xf32>
    %c0_3 = arith.constant 0 : index
    %c0_4 = arith.constant 0 : index
    %c0_5 = arith.constant 0 : index
    %16 = vector.load %arg7[%c0_3, %c0_4, %c0_5] : memref<3x1x128xf32, #tpu.memory_space<vmem>>, vector<1x1x128xf32>
    %17 = vector.shape_cast %16 : vector<1x1x128xf32> to vector<1x128xf32>
    %18 = vector.broadcast %17 : vector<1x128xf32> to vector<32x128xf32>
    %19 = arith.addf %15, %18 : vector<32x128xf32>
    %cst_6 = arith.constant 0.000000e+00 : f32
    %20 = vector.broadcast %cst_6 : f32 to vector<32x128xf32>
    %21 = arith.maximumf %19, %20 : vector<32x128xf32>
    %22 = arith.truncf %21 : vector<32x128xf32> to vector<32x128xbf16>
    %c0_7 = arith.constant 0 : index
    %c0_8 = arith.constant 0 : index
    %23 = vector.load %arg2[%c0_7, %c0_8] : memref<512x128xbf16, #tpu.memory_space<vmem>>, vector<512x128xbf16>
    %cst_9 = arith.constant 0.000000e+00 : bf16
    %24 = vector.broadcast %cst_9 : bf16 to vector<96x128xbf16>
    %25 = tpu.concatenate %22, %24 in 0 : vector<32x128xbf16>, vector<96x128xbf16> -> vector<128x128xbf16>
    %cst_10 = arith.constant dense<0.000000e+00> : vector<512x128xf32>
    %26 = tpu.matmul %23, %25, %cst_10 {dimension_numbers = #tpu.dot_dimension_numbers<[1], [0], [0], [1], [0, 0, 1, 1], [], []>} : vector<512x128xbf16>, vector<128x128xbf16>, vector<512x128xf32> -> vector<512x128xf32>
    %27 = arith.truncf %26 : vector<512x128xf32> to vector<512x128xbf16>
    %28 = vector.extract_strided_slice %27 {offsets = [0, 0], sizes = [32, 128], strides = [1, 1]} : vector<512x128xbf16> to vector<32x128xbf16>
    %29 = vector.extract_strided_slice %27 {offsets = [32, 0], sizes = [32, 128], strides = [1, 1]} : vector<512x128xbf16> to vector<32x128xbf16>
    %30 = vector.extract_strided_slice %27 {offsets = [64, 0], sizes = [32, 128], strides = [1, 1]} : vector<512x128xbf16> to vector<32x128xbf16>
    %31 = vector.extract_strided_slice %27 {offsets = [96, 0], sizes = [32, 128], strides = [1, 1]} : vector<512x128xbf16> to vector<32x128xbf16>
    %32 = vector.extract_strided_slice %27 {offsets = [128, 0], sizes = [32, 128], strides = [1, 1]} : vector<512x128xbf16> to vector<32x128xbf16>
    %33 = vector.extract_strided_slice %27 {offsets = [160, 0], sizes = [32, 128], strides = [1, 1]} : vector<512x128xbf16> to vector<32x128xbf16>
    %34 = vector.extract_strided_slice %27 {offsets = [192, 0], sizes = [32, 128], strides = [1, 1]} : vector<512x128xbf16> to vector<32x128xbf16>
    %35 = vector.extract_strided_slice %27 {offsets = [224, 0], sizes = [32, 128], strides = [1, 1]} : vector<512x128xbf16> to vector<32x128xbf16>
    %36 = vector.extract_strided_slice %27 {offsets = [256, 0], sizes = [32, 128], strides = [1, 1]} : vector<512x128xbf16> to vector<32x128xbf16>
    %37 = vector.extract_strided_slice %27 {offsets = [288, 0], sizes = [32, 128], strides = [1, 1]} : vector<512x128xbf16> to vector<32x128xbf16>
    %38 = vector.extract_strided_slice %27 {offsets = [320, 0], sizes = [32, 128], strides = [1, 1]} : vector<512x128xbf16> to vector<32x128xbf16>
    %39 = vector.extract_strided_slice %27 {offsets = [352, 0], sizes = [32, 128], strides = [1, 1]} : vector<512x128xbf16> to vector<32x128xbf16>
    %40 = vector.extract_strided_slice %27 {offsets = [384, 0], sizes = [32, 128], strides = [1, 1]} : vector<512x128xbf16> to vector<32x128xbf16>
    %41 = vector.extract_strided_slice %27 {offsets = [416, 0], sizes = [32, 128], strides = [1, 1]} : vector<512x128xbf16> to vector<32x128xbf16>
    %42 = vector.extract_strided_slice %27 {offsets = [448, 0], sizes = [32, 128], strides = [1, 1]} : vector<512x128xbf16> to vector<32x128xbf16>
    %43 = vector.extract_strided_slice %27 {offsets = [480, 0], sizes = [32, 128], strides = [1, 1]} : vector<512x128xbf16> to vector<32x128xbf16>
    %44 = tpu.concatenate %28, %29, %30, %31, %32, %33, %34, %35, %36, %37, %38, %39, %40, %41, %42, %43 in 1 : vector<32x128xbf16>, vector<32x128xbf16>, vector<32x128xbf16>, vector<32x128xbf16>, vector<32x128xbf16>, vector<32x128xbf16>, vector<32x128xbf16>, vector<32x128xbf16>, vector<32x128xbf16>, vector<32x128xbf16>, vector<32x128xbf16>, vector<32x128xbf16>, vector<32x128xbf16>, vector<32x128xbf16>, vector<32x128xbf16>, vector<32x128xbf16> -> vector<32x2048xbf16>
    %c0_11 = arith.constant 0 : index
    %c0_12 = arith.constant 0 : index
    %45 = vector.load %arg5[%c0_11, %c0_12] : memref<2048x128xbf16, #tpu.memory_space<vmem>>, vector<2048x128xbf16>
    %cst_13 = arith.constant dense<0.000000e+00> : vector<32x128xf32>
    %46 = tpu.matmul %44, %45, %cst_13 {dimension_numbers = #tpu.dot_dimension_numbers<[1], [0], [0], [1], [0, 0, 1, 1], [], []>} : vector<32x2048xbf16>, vector<2048x128xbf16>, vector<32x128xf32> -> vector<32x128xf32>
    %47 = vector.shape_cast %46 : vector<32x128xf32> to vector<4x8x128xf32>
    %48 = vector.extract_strided_slice %47 {offsets = [0, 0, 0], sizes = [1, 8, 128], strides = [1, 1, 1]} : vector<4x8x128xf32> to vector<1x8x128xf32>
    %49 = vector.shape_cast %48 : vector<1x8x128xf32> to vector<8x128xf32>
    %50 = vector.extract_strided_slice %47 {offsets = [1, 0, 0], sizes = [1, 8, 128], strides = [1, 1, 1]} : vector<4x8x128xf32> to vector<1x8x128xf32>
    %51 = vector.shape_cast %50 : vector<1x8x128xf32> to vector<8x128xf32>
    %52 = vector.extract_strided_slice %47 {offsets = [2, 0, 0], sizes = [1, 8, 128], strides = [1, 1, 1]} : vector<4x8x128xf32> to vector<1x8x128xf32>
    %53 = vector.shape_cast %52 : vector<1x8x128xf32> to vector<8x128xf32>
    %54 = vector.extract_strided_slice %47 {offsets = [3, 0, 0], sizes = [1, 8, 128], strides = [1, 1, 1]} : vector<4x8x128xf32> to vector<1x8x128xf32>
    %55 = vector.shape_cast %54 : vector<1x8x128xf32> to vector<8x128xf32>
    %56 = arith.maximumf %49, %51 : vector<8x128xf32>
    %57 = arith.maximumf %53, %55 : vector<8x128xf32>
    %58 = arith.maximumf %56, %57 : vector<8x128xf32>
    %c1 = arith.constant 1 : index
    %c0_14 = arith.constant 0 : index
    %c0_15 = arith.constant 0 : index
    %59 = vector.load %arg7[%c1, %c0_14, %c0_15] : memref<3x1x128xf32, #tpu.memory_space<vmem>>, vector<1x1x128xf32>
    %60 = vector.shape_cast %59 : vector<1x1x128xf32> to vector<1x128xf32>
    %61 = vector.broadcast %60 : vector<1x128xf32> to vector<8x128xf32>
    %62 = arith.addf %58, %61 : vector<8x128xf32>
    %cst_16 = arith.constant 0.000000e+00 : f32
    %63 = vector.broadcast %cst_16 : f32 to vector<8x128xf32>
    %64 = arith.maximumf %62, %63 : vector<8x128xf32>
    %65 = arith.truncf %64 : vector<8x128xf32> to vector<8x128xbf16>
    %c0_17 = arith.constant 0 : index
    %c0_18 = arith.constant 0 : index
    %66 = vector.load %arg3[%c0_17, %c0_18] : memref<288x128xbf16, #tpu.memory_space<vmem>>, vector<288x128xbf16>
    %cst_19 = arith.constant 0.000000e+00 : bf16
    %67 = vector.broadcast %cst_19 : bf16 to vector<120x128xbf16>
    %68 = tpu.concatenate %65, %67 in 0 : vector<8x128xbf16>, vector<120x128xbf16> -> vector<128x128xbf16>
    %cst_20 = arith.constant dense<0.000000e+00> : vector<288x128xf32>
    %69 = tpu.matmul %66, %68, %cst_20 {dimension_numbers = #tpu.dot_dimension_numbers<[1], [0], [0], [1], [0, 0, 1, 1], [], []>} : vector<288x128xbf16>, vector<128x128xbf16>, vector<288x128xf32> -> vector<288x128xf32>
    %70 = arith.truncf %69 : vector<288x128xf32> to vector<288x128xbf16>
    %71 = vector.extract_strided_slice %70 {offsets = [0, 0], sizes = [32, 128], strides = [1, 1]} : vector<288x128xbf16> to vector<32x128xbf16>
    %72 = vector.extract_strided_slice %70 {offsets = [32, 0], sizes = [32, 128], strides = [1, 1]} : vector<288x128xbf16> to vector<32x128xbf16>
    %73 = vector.extract_strided_slice %70 {offsets = [64, 0], sizes = [32, 128], strides = [1, 1]} : vector<288x128xbf16> to vector<32x128xbf16>
    %74 = vector.extract_strided_slice %70 {offsets = [96, 0], sizes = [32, 128], strides = [1, 1]} : vector<288x128xbf16> to vector<32x128xbf16>
    %75 = vector.extract_strided_slice %70 {offsets = [128, 0], sizes = [32, 128], strides = [1, 1]} : vector<288x128xbf16> to vector<32x128xbf16>
    %76 = vector.extract_strided_slice %70 {offsets = [160, 0], sizes = [32, 128], strides = [1, 1]} : vector<288x128xbf16> to vector<32x128xbf16>
    %77 = vector.extract_strided_slice %70 {offsets = [192, 0], sizes = [32, 128], strides = [1, 1]} : vector<288x128xbf16> to vector<32x128xbf16>
    %78 = vector.extract_strided_slice %70 {offsets = [224, 0], sizes = [32, 128], strides = [1, 1]} : vector<288x128xbf16> to vector<32x128xbf16>
    %79 = vector.extract_strided_slice %70 {offsets = [256, 0], sizes = [32, 128], strides = [1, 1]} : vector<288x128xbf16> to vector<32x128xbf16>
    %80 = tpu.concatenate %71, %72, %73, %74, %75, %76, %77, %78, %79 in 1 : vector<32x128xbf16>, vector<32x128xbf16>, vector<32x128xbf16>, vector<32x128xbf16>, vector<32x128xbf16>, vector<32x128xbf16>, vector<32x128xbf16>, vector<32x128xbf16>, vector<32x128xbf16> -> vector<32x1152xbf16>
    %c0_21 = arith.constant 0 : index
    %c0_22 = arith.constant 0 : index
    %81 = vector.load %arg6[%c0_21, %c0_22] : memref<1152x128xbf16, #tpu.memory_space<vmem>>, vector<1152x128xbf16>
    %cst_23 = arith.constant dense<0.000000e+00> : vector<32x128xf32>
    %82 = tpu.matmul %80, %81, %cst_23 {dimension_numbers = #tpu.dot_dimension_numbers<[1], [0], [0], [1], [0, 0, 1, 1], [], []>} : vector<32x1152xbf16>, vector<1152x128xbf16>, vector<32x128xf32> -> vector<32x128xf32>
    %83 = vector.shape_cast %82 : vector<32x128xf32> to vector<4x8x128xf32>
    %84 = vector.extract_strided_slice %83 {offsets = [0, 0, 0], sizes = [1, 8, 128], strides = [1, 1, 1]} : vector<4x8x128xf32> to vector<1x8x128xf32>
    %85 = vector.shape_cast %84 : vector<1x8x128xf32> to vector<8x128xf32>
    %86 = vector.extract_strided_slice %83 {offsets = [1, 0, 0], sizes = [1, 8, 128], strides = [1, 1, 1]} : vector<4x8x128xf32> to vector<1x8x128xf32>
    %87 = vector.shape_cast %86 : vector<1x8x128xf32> to vector<8x128xf32>
    %88 = vector.extract_strided_slice %83 {offsets = [2, 0, 0], sizes = [1, 8, 128], strides = [1, 1, 1]} : vector<4x8x128xf32> to vector<1x8x128xf32>
    %89 = vector.shape_cast %88 : vector<1x8x128xf32> to vector<8x128xf32>
    %90 = vector.extract_strided_slice %83 {offsets = [3, 0, 0], sizes = [1, 8, 128], strides = [1, 1, 1]} : vector<4x8x128xf32> to vector<1x8x128xf32>
    %91 = vector.shape_cast %90 : vector<1x8x128xf32> to vector<8x128xf32>
    %92 = arith.maximumf %85, %87 : vector<8x128xf32>
    %93 = arith.maximumf %89, %91 : vector<8x128xf32>
    %94 = arith.maximumf %92, %93 : vector<8x128xf32>
    %c2 = arith.constant 2 : index
    %c0_24 = arith.constant 0 : index
    %c0_25 = arith.constant 0 : index
    %95 = vector.load %arg7[%c2, %c0_24, %c0_25] : memref<3x1x128xf32, #tpu.memory_space<vmem>>, vector<1x1x128xf32>
    %96 = vector.shape_cast %95 : vector<1x1x128xf32> to vector<1x128xf32>
    %97 = vector.broadcast %96 : vector<1x128xf32> to vector<8x128xf32>
    %98 = arith.addf %94, %97 : vector<8x128xf32>
    %cst_26 = arith.constant 0.000000e+00 : f32
    %99 = vector.broadcast %cst_26 : f32 to vector<8x128xf32>
    %100 = arith.maximumf %98, %99 : vector<8x128xf32>
    %c0_27 = arith.constant 0 : index
    %c0_28 = arith.constant 0 : index
    %101 = vector.load %arg8[%c0_27, %c0_28] : memref<8x128xf32, #tpu.memory_space<vmem>>, vector<8x128xf32>
    tpu.vector_store %arg8[%c0_27, %c0_28], %100 {strides = array<i32>} : memref<8x128xf32, #tpu.memory_space<vmem>>, vector<8x128xf32>,
    return
  }
  func.func @transform_0(%arg0: i32) -> (i32, i32) {
    %c0_i32 = arith.constant 0 : i32
    %c0_i32_0 = arith.constant 0 : i32
    return %arg0, %c0_i32 : i32, i32
  }
  func.func @transform_1(%arg0: i32) -> (i32, i32) {
    %c0_i32 = arith.constant 0 : i32
    %c0_i32_0 = arith.constant 0 : i32
    %c0_i32_1 = arith.constant 0 : i32
    return %c0_i32, %c0_i32_0 : i32, i32
  }
  func.func @transform_2(%arg0: i32) -> (i32, i32) {
    %c0_i32 = arith.constant 0 : i32
    %c0_i32_0 = arith.constant 0 : i32
    %c0_i32_1 = arith.constant 0 : i32
    return %c0_i32, %c0_i32_0 : i32, i32
  }
  func.func @transform_3(%arg0: i32) -> (i32, i32) {
    %c0_i32 = arith.constant 0 : i32
    %c0_i32_0 = arith.constant 0 : i32
    %c0_i32_1 = arith.constant 0 : i32
    return %c0_i32, %c0_i32_0 : i32, i32
  }
  func.func @transform_4(%arg0: i32) -> (i32, i32) {
    %c0_i32 = arith.constant 0 : i32
    %c0_i32_0 = arith.constant 0 : i32
    %c0_i32_1 = arith.constant 0 : i32
    return %c0_i32, %c0_i32_0 : i32, i32
  }
  func.func @transform_5(%arg0: i32) -> (i32, i32) {
    %c0_i32 = arith.constant 0 : i32
    %c0_i32_0 = arith.constant 0 : i32
    %c0_i32_1 = arith.constant 0 : i32
    return %c0_i32, %c0_i32_0 : i32, i32
  }
  func.func @transform_6(%arg0: i32) -> (i32, i32, i32) {
    %c0_i32 = arith.constant 0 : i32
    %c0_i32_0 = arith.constant 0 : i32
    %c0_i32_1 = arith.constant 0 : i32
    %c0_i32_2 = arith.constant 0 : i32
    return %c0_i32, %c0_i32_0, %c0_i32_1 : i32, i32, i32
  }
  func.func @transform_7(%arg0: i32) -> (i32, i32) {
    %c0_i32 = arith.constant 0 : i32
    %c0_i32_0 = arith.constant 0 : i32
    return %arg0, %c0_i32 : i32, i32
  }
}

</mosaic_0001>

<llo_original>
// kernel: cnn_forward.1
$region0: #{cnn_forward.1}
  #allocation0 [shape = 'u32[]', space=smem, size = 0x4, offset = 0x4, fixed_abs, tag = 'smem constant byte address 0x4 - core index']
  #allocation1 [shape = 'u32[72,128]{1,0:T(1,128)}', space=vmem, size = 0x9000, scoped, tag = 'internal scratch']
  %s0 = inlined_call_operand.vmem [shape: bf16[128,128], index: 0, kind: input, shape index: {}]
  %s1 = inlined_call_operand.vmem [shape: bf16[512,128], index: 1, kind: input, shape index: {}]
  %s2 = inlined_call_operand.vmem [shape: bf16[288,128], index: 2, kind: input, shape index: {}]
  %s3 = inlined_call_operand.vmem [shape: bf16[128,128], index: 3, kind: input, shape index: {}]
  %s4 = inlined_call_operand.vmem [shape: bf16[2048,128], index: 4, kind: input, shape index: {}]
  %s5 = inlined_call_operand.vmem [shape: bf16[1152,128], index: 5, kind: input, shape index: {}]
  %s6 = inlined_call_operand.vmem [shape: f32[3,1,128], index: 6, kind: input, shape index: {}]
  %s7 = inlined_call_operand.vmem [shape: f32[8,128], index: 7, kind: output, shape index: {}]
  %s8 = sld [smem:[#allocation0]]
  $region38: #{cnn_forward.1} parent=0
    _
  %s10 = ssub.s32 1, %s8
  %s11 = scalar_select 0, %s10, %s8
  // Predicated region
  $region2: #{cnn_forward.1} parent=0 // pred_check
    _
  $region3: #{cnn_forward.1} parent=0 // pred_check_branch
    %13 = sbr.rel (0) target = $region5
  $region4: #{cnn_forward.1} parent=0 // pred_region
    _
  $region5: #{cnn_forward.1} parent=0 // pred_fallthru
    _
  // Predicated region
  $region6: #{cnn_forward.1} parent=0 // pred_check
    _
  $region7: #{cnn_forward.1} parent=0 // pred_check_branch
    %15 = sbr.rel (0) target = $region9
  $region8: #{cnn_forward.1} parent=0 // pred_region
    _
  $region9: #{cnn_forward.1} parent=0 // pred_fallthru
    _
  // Predicated region
  $region10: #{cnn_forward.1} parent=0 // pred_check
    _
  $region11: #{cnn_forward.1} parent=0 // pred_check_branch
    %17 = sbr.rel (0) target = $region13
  $region12: #{cnn_forward.1} parent=0 // pred_region
    _
  $region13: #{cnn_forward.1} parent=0 // pred_fallthru
    _
  // Predicated region
  $region14: #{cnn_forward.1} parent=0 // pred_check
    _
  $region15: #{cnn_forward.1} parent=0 // pred_check_branch
    %19 = sbr.rel (0) target = $region17
  $region16: #{cnn_forward.1} parent=0 // pred_region
    _
  $region17: #{cnn_forward.1} parent=0 // pred_fallthru
    _
  // Predicated region
  $region18: #{cnn_forward.1} parent=0 // pred_check
    _
  $region19: #{cnn_forward.1} parent=0 // pred_check_branch
    %21 = sbr.rel (0) target = $region21
  $region20: #{cnn_forward.1} parent=0 // pred_region
    _
  $region21: #{cnn_forward.1} parent=0 // pred_fallthru
    _
  // Predicated region
  $region22: #{cnn_forward.1} parent=0 // pred_check
    _
  $region23: #{cnn_forward.1} parent=0 // pred_check_branch
    %23 = sbr.rel (0) target = $region25
  $region24: #{cnn_forward.1} parent=0 // pred_region
    _
  $region25: #{cnn_forward.1} parent=0 // pred_fallthru
    _
  // Predicated region
  $region26: #{cnn_forward.1} parent=0 // pred_check
    _
  $region27: #{cnn_forward.1} parent=0 // pred_check_branch
    %25 = sbr.rel (0) target = $region29
  $region28: #{cnn_forward.1} parent=0 // pred_region
    _
  $region29: #{cnn_forward.1} parent=0 // pred_fallthru
    _
  %v27 = vld [vmem:[%s0] sm:$0xf]
  %v28 = vld [vmem:[%s0 + $0x4] sm:$0xf]
  %v29 = vld [vmem:[%s0 + $0x8] sm:$0xf]
  %v30 = vld [vmem:[%s0 + $0xc] sm:$0xf]
  %v31 = vld [vmem:[%s0 + $0x10] sm:$0xf]
  %v32 = vld [vmem:[%s0 + $0x14] sm:$0xf]
  %v33 = vld [vmem:[%s0 + $0x18] sm:$0xf]
  %v34 = vld [vmem:[%s0 + $0x1c] sm:$0xf]
  %v35 = vld [vmem:[%s0 + $0x20] sm:$0xf]
  %v36 = vld [vmem:[%s0 + $0x24] sm:$0xf]
  %v37 = vld [vmem:[%s0 + $0x28] sm:$0xf]
  %v38 = vld [vmem:[%s0 + $0x2c] sm:$0xf]
  %v39 = vld [vmem:[%s0 + $0x30] sm:$0xf]
  %v40 = vld [vmem:[%s0 + $0x34] sm:$0xf]
  %v41 = vld [vmem:[%s0 + $0x38] sm:$0xf]
  %v42 = vld [vmem:[%s0 + $0x3c] sm:$0xf]
  %v43 = vld [vmem:[%s3] sm:$0xf]
  %v44 = vld [vmem:[%s3 + $0x4] sm:$0xf]
  %v45 = vld [vmem:[%s3 + $0x8] sm:$0xf]
  %v46 = vld [vmem:[%s3 + $0xc] sm:$0xf]
  %v47 = vld [vmem:[%s3 + $0x10] sm:$0xf]
  %v48 = vld [vmem:[%s3 + $0x14] sm:$0xf]
  %v49 = vld [vmem:[%s3 + $0x18] sm:$0xf]
  %v50 = vld [vmem:[%s3 + $0x1c] sm:$0xf]
  %v51 = vld [vmem:[%s3 + $0x20] sm:$0xf]
  %v52 = vld [vmem:[%s3 + $0x24] sm:$0xf]
  %v53 = vld [vmem:[%s3 + $0x28] sm:$0xf]
  %v54 = vld [vmem:[%s3 + $0x2c] sm:$0xf]
  %v55 = vld [vmem:[%s3 + $0x30] sm:$0xf]
  %v56 = vld [vmem:[%s3 + $0x34] sm:$0xf]
  %v57 = vld [vmem:[%s3 + $0x38] sm:$0xf]
  %v58 = vld [vmem:[%s3 + $0x3c] sm:$0xf]
  %v75 = vunpack.c.l.b16 %v27
  %v76 = vunpack.c.l.b16 %v28
  %v77 = vunpack.c.l.b16 %v29
  %v78 = vunpack.c.l.b16 %v30
  %v79 = vunpack.c.l.b16 %v31
  %v80 = vunpack.c.l.b16 %v32
  %v81 = vunpack.c.l.b16 %v33
  %v82 = vunpack.c.l.b16 %v34
  %v83 = vunpack.c.l.b16 %v35
  %v84 = vunpack.c.l.b16 %v36
  %v85 = vunpack.c.l.b16 %v37
  %v86 = vunpack.c.l.b16 %v38
  %v87 = vunpack.c.l.b16 %v39
  %v88 = vunpack.c.l.b16 %v40
  %v89 = vunpack.c.l.b16 %v41
  %v90 = vunpack.c.l.b16 %v42
  %v91 = vpack.c.b16 %v76, %v75
  %v92 = vpack.c.b16 %v78, %v77
  %v93 = vpack.c.b16 %v80, %v79
  %v94 = vpack.c.b16 %v82, %v81
  %v95 = vpack.c.b16 %v84, %v83
  %v96 = vpack.c.b16 %v86, %v85
  %v97 = vpack.c.b16 %v88, %v87
  %v98 = vpack.c.b16 %v90, %v89
  %v123 = vunpack.c.l.b16 %v43
  %v124 = vunpack.c.l.b16 %v44
  %v125 = vunpack.c.l.b16 %v45
  %v126 = vunpack.c.l.b16 %v46
  %v127 = vunpack.c.l.b16 %v47
  %v128 = vunpack.c.l.b16 %v48
  %v129 = vunpack.c.l.b16 %v49
  %v130 = vunpack.c.l.b16 %v50
  %v131 = vunpack.c.l.b16 %v51
  %v132 = vunpack.c.l.b16 %v52
  %v133 = vunpack.c.l.b16 %v53
  %v134 = vunpack.c.l.b16 %v54
  %v135 = vunpack.c.l.b16 %v55
  %v136 = vunpack.c.l.b16 %v56
  %v137 = vunpack.c.l.b16 %v57
  %v138 = vunpack.c.l.b16 %v58
  %v139 = vpack.c.b16 %v124, %v123
  %v140 = vpack.c.b16 %v126, %v125
  %v141 = vpack.c.b16 %v128, %v127
  %v142 = vpack.c.b16 %v130, %v129
  %v143 = vpack.c.b16 %v132, %v131
  %v144 = vpack.c.b16 %v134, %v133
  %v145 = vpack.c.b16 %v136, %v135
  %v146 = vpack.c.b16 %v138, %v137
  %155 = vmatpush.bf16.msra.mxu0 %v146
  %156 = vmatpush.bf16.msra.mxu0 %v145
  %157 = vmatpush.bf16.msra.mxu0 %v144
  %158 = vmatpush.bf16.msra.mxu0 %v143
  %159 = vmatpush.bf16.msra.mxu0 %v142
  %160 = vmatpush.bf16.msra.mxu0 %v141
  %161 = vmatpush.bf16.msra.mxu0 %v140
  %162 = vmatpush.bf16.msra.mxu0 %v139
  %163 = vmatmul.bf16.gmra.mxu0 %v91
  %v164 = vpop.f32.mrf.mxu0
  %v165 = vadd.f32 0.0, %v164
  %v166 = vpop.f32.mrf.mxu0
  %v167 = vadd.f32 0.0, %v166
  %168 = vmatmul.bf16.gmra.mxu0 %v92
  %v169 = vpop.f32.mrf.mxu0
  %v170 = vadd.f32 0.0, %v169
  %v171 = vpop.f32.mrf.mxu0
  %v172 = vadd.f32 0.0, %v171
  %173 = vmatmul.bf16.gmra.mxu0 %v93
  %v174 = vpop.f32.mrf.mxu0
  %v175 = vadd.f32 0.0, %v174
  %v176 = vpop.f32.mrf.mxu0
  %v177 = vadd.f32 0.0, %v176
  %178 = vmatmul.bf16.gmra.mxu0 %v94
  %v179 = vpop.f32.mrf.mxu0
  %v180 = vadd.f32 0.0, %v179
  %v181 = vpop.f32.mrf.mxu0
  %v182 = vadd.f32 0.0, %v181
  %183 = vmatmul.bf16.gmra.mxu0 %v95
  %v184 = vpop.f32.mrf.mxu0
  %v185 = vadd.f32 0.0, %v184
  %v186 = vpop.f32.mrf.mxu0
  %v187 = vadd.f32 0.0, %v186
  %188 = vmatmul.bf16.gmra.mxu0 %v96
  %v189 = vpop.f32.mrf.mxu0
  %v190 = vadd.f32 0.0, %v189
  %v191 = vpop.f32.mrf.mxu0
  %v192 = vadd.f32 0.0, %v191
  %193 = vmatmul.bf16.gmra.mxu0 %v97
  %v194 = vpop.f32.mrf.mxu0
  %v195 = vadd.f32 0.0, %v194
  %v196 = vpop.f32.mrf.mxu0
  %v197 = vadd.f32 0.0, %v196
  %198 = vmatmul.bf16.gmra.mxu0 %v98
  %v199 = vpop.f32.mrf.mxu0
  %v200 = vadd.f32 0.0, %v199
  %v201 = vpop.f32.mrf.mxu0
  %v202 = vadd.f32 0.0, %v201
  %203 = vdwg.mxu0
  %v204 = vmax.f32 %v165, %v170
  %v205 = vmax.f32 %v167, %v172
  %v206 = vmax.f32 %v185, %v190
  %v207 = vmax.f32 %v187, %v192
  %v208 = vmax.f32 %v175, %v180
  %v209 = vmax.f32 %v177, %v182
  %v210 = vmax.f32 %v195, %v200
  %v211 = vmax.f32 %v197, %v202
  %v212 = vmax.f32 %v204, %v208
  %v213 = vmax.f32 %v205, %v209
  %v214 = vmax.f32 %v206, %v210
  %v215 = vmax.f32 %v207, %v211
  %v216 = vld [vmem:[%s6] sm:$0x1]
  %v218 = vperm.slane %v216, 0
  %v220 = vadd.f32 %v212, %v218
  %v221 = vadd.f32 %v213, %v218
  %v222 = vadd.f32 %v214, %v218
  %v223 = vadd.f32 %v215, %v218
  %v224 = vmax.f32 %v220, 0.0
  %v225 = vmax.f32 %v221, 0.0
  %v226 = vmax.f32 %v222, 0.0
  %v227 = vmax.f32 %v223, 0.0
  %v228 = vpack.c.bf16 %v224, %v224
  %v229 = vpack.c.bf16 %v225, %v225
  %v230 = vpack.c.bf16 %v226, %v226
  %v231 = vpack.c.bf16 %v227, %v227
  %v232 = vld [vmem:[%s1] sm:$0xf]
  %v233 = vld [vmem:[%s1 + $0x4] sm:$0xf]
  %v234 = vld [vmem:[%s1 + $0x8] sm:$0xf]
  %v235 = vld [vmem:[%s1 + $0xc] sm:$0xf]
  %v236 = vld [vmem:[%s1 + $0x10] sm:$0xf]
  %v237 = vld [vmem:[%s1 + $0x14] sm:$0xf]
  %v238 = vld [vmem:[%s1 + $0x18] sm:$0xf]
  %v239 = vld [vmem:[%s1 + $0x1c] sm:$0xf]
  %v240 = vld [vmem:[%s1 + $0x20] sm:$0xf]
  %v241 = vld [vmem:[%s1 + $0x24] sm:$0xf]
  %v242 = vld [vmem:[%s1 + $0x28] sm:$0xf]
  %v243 = vld [vmem:[%s1 + $0x2c] sm:$0xf]
  %v244 = vld [vmem:[%s1 + $0x30] sm:$0xf]
  %v245 = vld [vmem:[%s1 + $0x34] sm:$0xf]
  %v246 = vld [vmem:[%s1 + $0x38] sm:$0xf]
  %v247 = vld [vmem:[%s1 + $0x3c] sm:$0xf]
  %v248 = vld [vmem:[%s1 + $0x40] sm:$0xf]
  %v249 = vld [vmem:[%s1 + $0x44] sm:$0xf]
  %v250 = vld [vmem:[%s1 + $0x48] sm:$0xf]
  %v251 = vld [vmem:[%s1 + $0x4c] sm:$0xf]
  %v252 = vld [vmem:[%s1 + $0x50] sm:$0xf]
  %v253 = vld [vmem:[%s1 + $0x54] sm:$0xf]
  %v254 = vld [vmem:[%s1 + $0x58] sm:$0xf]
  %v255 = vld [vmem:[%s1 + $0x5c] sm:$0xf]
  %v256 = vld [vmem:[%s1 + $0x60] sm:$0xf]
  %v257 = vld [vmem:[%s1 + $0x64] sm:$0xf]
  %v258 = vld [vmem:[%s1 + $0x68] sm:$0xf]
  %v259 = vld [vmem:[%s1 + $0x6c] sm:$0xf]
  %v260 = vld [vmem:[%s1 + $0x70] sm:$0xf]
  %v261 = vld [vmem:[%s1 + $0x74] sm:$0xf]
  %v262 = vld [vmem:[%s1 + $0x78] sm:$0xf]
  %v263 = vld [vmem:[%s1 + $0x7c] sm:$0xf]
  %v264 = vld [vmem:[%s1 + $0x80] sm:$0xf]
  %v265 = vld [vmem:[%s1 + $0x84] sm:$0xf]
  %v266 = vld [vmem:[%s1 + $0x88] sm:$0xf]
  %v267 = vld [vmem:[%s1 + $0x8c] sm:$0xf]
  %v268 = vld [vmem:[%s1 + $0x90] sm:$0xf]
  %v269 = vld [vmem:[%s1 + $0x94] sm:$0xf]
  %v270 = vld [vmem:[%s1 + $0x98] sm:$0xf]
  %v271 = vld [vmem:[%s1 + $0x9c] sm:$0xf]
  %v272 = vld [vmem:[%s1 + $0xa0] sm:$0xf]
  %v273 = vld [vmem:[%s1 + $0xa4] sm:$0xf]
  %v274 = vld [vmem:[%s1 + $0xa8] sm:$0xf]
  %v275 = vld [vmem:[%s1 + $0xac] sm:$0xf]
  %v276 = vld [vmem:[%s1 + $0xb0] sm:$0xf]
  %v277 = vld [vmem:[%s1 + $0xb4] sm:$0xf]
  %v278 = vld [vmem:[%s1 + $0xb8] sm:$0xf]
  %v279 = vld [vmem:[%s1 + $0xbc] sm:$0xf]
  %v280 = vld [vmem:[%s1 + $0xc0] sm:$0xf]
  %v281 = vld [vmem:[%s1 + $0xc4] sm:$0xf]
  %v282 = vld [vmem:[%s1 + $0xc8] sm:$0xf]
  %v283 = vld [vmem:[%s1 + $0xcc] sm:$0xf]
  %v284 = vld [vmem:[%s1 + $0xd0] sm:$0xf]
  %v285 = vld [vmem:[%s1 + $0xd4] sm:$0xf]
  %v286 = vld [vmem:[%s1 + $0xd8] sm:$0xf]
  %v287 = vld [vmem:[%s1 + $0xdc] sm:$0xf]
  %v288 = vld [vmem:[%s1 + $0xe0] sm:$0xf]
  %v289 = vld [vmem:[%s1 + $0xe4] sm:$0xf]
  %v290 = vld [vmem:[%s1 + $0xe8] sm:$0xf]
  %v291 = vld [vmem:[%s1 + $0xec] sm:$0xf]
  %v292 = vld [vmem:[%s1 + $0xf0] sm:$0xf]
  %v293 = vld [vmem:[%s1 + $0xf4] sm:$0xf]
  %v294 = vld [vmem:[%s1 + $0xf8] sm:$0xf]
  %v295 = vld [vmem:[%s1 + $0xfc] sm:$0xf]
  %v300 = vunpack.c.l.b16 %v228
  %v301 = vunpack.c.l.b16 %v229
  %v302 = vunpack.c.l.b16 %v230
  %v303 = vunpack.c.l.b16 %v231
  %v304 = vpack.c.b16 %v301, %v300
  %v305 = vpack.c.b16 %v303, %v302
  %v372 = vunpack.c.l.b16 %v232
  %v373 = vunpack.c.l.b16 %v233
  %v374 = vunpack.c.l.b16 %v234
  %v375 = vunpack.c.l.b16 %v235
  %v376 = vunpack.c.l.b16 %v236
  %v377 = vunpack.c.l.b16 %v237
  %v378 = vunpack.c.l.b16 %v238
  %v379 = vunpack.c.l.b16 %v239
  %v380 = vunpack.c.l.b16 %v240
  %v381 = vunpack.c.l.b16 %v241
  %v382 = vunpack.c.l.b16 %v242
  %v383 = vunpack.c.l.b16 %v243
  %v384 = vunpack.c.l.b16 %v244
  %v385 = vunpack.c.l.b16 %v245
  %v386 = vunpack.c.l.b16 %v246
  %v387 = vunpack.c.l.b16 %v247
  %v388 = vunpack.c.l.b16 %v248
  %v389 = vunpack.c.l.b16 %v249
  %v390 = vunpack.c.l.b16 %v250
  %v391 = vunpack.c.l.b16 %v251
  %v392 = vunpack.c.l.b16 %v252
  %v393 = vunpack.c.l.b16 %v253
  %v394 = vunpack.c.l.b16 %v254
  %v395 = vunpack.c.l.b16 %v255
  %v396 = vunpack.c.l.b16 %v256
  %v397 = vunpack.c.l.b16 %v257
  %v398 = vunpack.c.l.b16 %v258
  %v399 = vunpack.c.l.b16 %v259
  %v400 = vunpack.c.l.b16 %v260
  %v401 = vunpack.c.l.b16 %v261
  %v402 = vunpack.c.l.b16 %v262
  %v403 = vunpack.c.l.b16 %v263
  %v404 = vunpack.c.l.b16 %v264
  %v405 = vunpack.c.l.b16 %v265
  %v406 = vunpack.c.l.b16 %v266
  %v407 = vunpack.c.l.b16 %v267
  %v408 = vunpack.c.l.b16 %v268
  %v409 = vunpack.c.l.b16 %v269
  %v410 = vunpack.c.l.b16 %v270
  %v411 = vunpack.c.l.b16 %v271
  %v412 = vunpack.c.l.b16 %v272
  %v413 = vunpack.c.l.b16 %v273
  %v414 = vunpack.c.l.b16 %v274
  %v415 = vunpack.c.l.b16 %v275
  %v416 = vunpack.c.l.b16 %v276
  %v417 = vunpack.c.l.b16 %v277
  %v418 = vunpack.c.l.b16 %v278
  %v419 = vunpack.c.l.b16 %v279
  %v420 = vunpack.c.l.b16 %v280
  %v421 = vunpack.c.l.b16 %v281
  %v422 = vunpack.c.l.b16 %v282
  %v423 = vunpack.c.l.b16 %v283
  %v424 = vunpack.c.l.b16 %v284
  %v425 = vunpack.c.l.b16 %v285
  %v426 = vunpack.c.l.b16 %v286
  %v427 = vunpack.c.l.b16 %v287
  %v428 = vunpack.c.l.b16 %v288
  %v429 = vunpack.c.l.b16 %v289
  %v430 = vunpack.c.l.b16 %v290
  %v431 = vunpack.c.l.b16 %v291
  %v432 = vunpack.c.l.b16 %v292
  %v433 = vunpack.c.l.b16 %v293
  %v434 = vunpack.c.l.b16 %v294
  %v435 = vunpack.c.l.b16 %v295
  %v436 = vpack.c.b16 %v373, %v372
  %v437 = vpack.c.b16 %v375, %v374
  %v438 = vpack.c.b16 %v377, %v376
  %v439 = vpack.c.b16 %v379, %v378
  %v440 = vpack.c.b16 %v381, %v380
  %v441 = vpack.c.b16 %v383, %v382
  %v442 = vpack.c.b16 %v385, %v384
  %v443 = vpack.c.b16 %v387, %v386
  %v444 = vpack.c.b16 %v389, %v388
  %v445 = vpack.c.b16 %v391, %v390
  %v446 = vpack.c.b16 %v393, %v392
  %v447 = vpack.c.b16 %v395, %v394
  %v448 = vpack.c.b16 %v397, %v396
  %v449 = vpack.c.b16 %v399, %v398
  %v450 = vpack.c.b16 %v401, %v400
  %v451 = vpack.c.b16 %v403, %v402
  %v452 = vpack.c.b16 %v405, %v404
  %v453 = vpack.c.b16 %v407, %v406
  %v454 = vpack.c.b16 %v409, %v408
  %v455 = vpack.c.b16 %v411, %v410
  %v456 = vpack.c.b16 %v413, %v412
  %v457 = vpack.c.b16 %v415, %v414
  %v458 = vpack.c.b16 %v417, %v416
  %v459 = vpack.c.b16 %v419, %v418
  %v460 = vpack.c.b16 %v421, %v420
  %v461 = vpack.c.b16 %v423, %v422
  %v462 = vpack.c.b16 %v425, %v424
  %v463 = vpack.c.b16 %v427, %v426
  %v464 = vpack.c.b16 %v429, %v428
  %v465 = vpack.c.b16 %v431, %v430
  %v466 = vpack.c.b16 %v433, %v432
  %v467 = vpack.c.b16 %v435, %v434
  %500 = vmatpush.bf16.msra.mxu0 0
  %501 = vmatpush.bf16.msra.mxu0 0
  %502 = vmatpush.bf16.msra.mxu0 0
  %503 = vmatpush.bf16.msra.mxu0 0
  %504 = vmatpush.bf16.msra.mxu0 0
  %505 = vmatpush.bf16.msra.mxu0 0
  %506 = vmatpush.bf16.msra.mxu0 %v305
  %507 = vmatpush.bf16.msra.mxu0 %v304
  %508 = vmatmul.bf16.gmra.mxu0 %v436
  %v509 = vpop.f32.mrf.mxu0
  %v510 = vadd.f32 0.0, %v509
  %v511 = vpop.f32.mrf.mxu0
  %v512 = vadd.f32 0.0, %v511
  %513 = vmatmul.bf16.gmra.mxu0 %v437
  %v514 = vpop.f32.mrf.mxu0
  %v515 = vadd.f32 0.0, %v514
  %v516 = vpop.f32.mrf.mxu0
  %v517 = vadd.f32 0.0, %v516
  %518 = vmatmul.bf16.gmra.mxu0 %v438
  %v519 = vpop.f32.mrf.mxu0
  %v520 = vadd.f32 0.0, %v519
  %v521 = vpop.f32.mrf.mxu0
  %v522 = vadd.f32 0.0, %v521
  %523 = vmatmul.bf16.gmra.mxu0 %v439
  %v524 = vpop.f32.mrf.mxu0
  %v525 = vadd.f32 0.0, %v524
  %v526 = vpop.f32.mrf.mxu0
  %v527 = vadd.f32 0.0, %v526
  %528 = vmatmul.bf16.gmra.mxu0 %v440
  %v529 = vpop.f32.mrf.mxu0
  %v530 = vadd.f32 0.0, %v529
  %v531 = vpop.f32.mrf.mxu0
  %v532 = vadd.f32 0.0, %v531
  %533 = vmatmul.bf16.gmra.mxu0 %v441
  %v534 = vpop.f32.mrf.mxu0
  %v535 = vadd.f32 0.0, %v534
  %v536 = vpop.f32.mrf.mxu0
  %v537 = vadd.f32 0.0, %v536
  %538 = vmatmul.bf16.gmra.mxu0 %v442
  %v539 = vpop.f32.mrf.mxu0
  %v540 = vadd.f32 0.0, %v539
  %v541 = vpop.f32.mrf.mxu0
  %v542 = vadd.f32 0.0, %v541
  %543 = vmatmul.bf16.gmra.mxu0 %v443
  %v544 = vpop.f32.mrf.mxu0
  %v545 = vadd.f32 0.0, %v544
  %v546 = vpop.f32.mrf.mxu0
  %v547 = vadd.f32 0.0, %v546
  %548 = vmatmul.bf16.gmra.mxu0 %v444
  %v549 = vpop.f32.mrf.mxu0
  %v550 = vadd.f32 0.0, %v549
  %v551 = vpop.f32.mrf.mxu0
  %v552 = vadd.f32 0.0, %v551
  %553 = vmatmul.bf16.gmra.mxu0 %v445
  %v554 = vpop.f32.mrf.mxu0
  %v555 = vadd.f32 0.0, %v554
  %v556 = vpop.f32.mrf.mxu0
  %v557 = vadd.f32 0.0, %v556
  %558 = vmatmul.bf16.gmra.mxu0 %v446
  %v559 = vpop.f32.mrf.mxu0
  %v560 = vadd.f32 0.0, %v559
  %v561 = vpop.f32.mrf.mxu0
  %v562 = vadd.f32 0.0, %v561
  %563 = vmatmul.bf16.gmra.mxu0 %v447
  %v564 = vpop.f32.mrf.mxu0
  %v565 = vadd.f32 0.0, %v564
  %v566 = vpop.f32.mrf.mxu0
  %v567 = vadd.f32 0.0, %v566
  %568 = vmatmul.bf16.gmra.mxu0 %v448
  %v569 = vpop.f32.mrf.mxu0
  %v570 = vadd.f32 0.0, %v569
  %v571 = vpop.f32.mrf.mxu0
  %v572 = vadd.f32 0.0, %v571
  %573 = vmatmul.bf16.gmra.mxu0 %v449
  %v574 = vpop.f32.mrf.mxu0
  %v575 = vadd.f32 0.0, %v574
  %v576 = vpop.f32.mrf.mxu0
  %v577 = vadd.f32 0.0, %v576
  %578 = vmatmul.bf16.gmra.mxu0 %v450
  %v579 = vpop.f32.mrf.mxu0
  %v580 = vadd.f32 0.0, %v579
  %v581 = vpop.f32.mrf.mxu0
  %v582 = vadd.f32 0.0, %v581
  %583 = vmatmul.bf16.gmra.mxu0 %v451
  %v584 = vpop.f32.mrf.mxu0
  %v585 = vadd.f32 0.0, %v584
  %v586 = vpop.f32.mrf.mxu0
  %v587 = vadd.f32 0.0, %v586
  %588 = vmatmul.bf16.gmra.mxu0 %v452
  %v589 = vpop.f32.mrf.mxu0
  %v590 = vadd.f32 0.0, %v589
  %v591 = vpop.f32.mrf.mxu0
  %v592 = vadd.f32 0.0, %v591
  %593 = vmatmul.bf16.gmra.mxu0 %v453
  %v594 = vpop.f32.mrf.mxu0
  %v595 = vadd.f32 0.0, %v594
  %v596 = vpop.f32.mrf.mxu0
  %v597 = vadd.f32 0.0, %v596
  %598 = vmatmul.bf16.gmra.mxu0 %v454
  %v599 = vpop.f32.mrf.mxu0
  %v600 = vadd.f32 0.0, %v599
  %v601 = vpop.f32.mrf.mxu0
  %v602 = vadd.f32 0.0, %v601
  %603 = vmatmul.bf16.gmra.mxu0 %v455
  %v604 = vpop.f32.mrf.mxu0
  %v605 = vadd.f32 0.0, %v604
  %v606 = vpop.f32.mrf.mxu0
  %v607 = vadd.f32 0.0, %v606
  %608 = vmatmul.bf16.gmra.mxu0 %v456
  %v609 = vpop.f32.mrf.mxu0
  %v610 = vadd.f32 0.0, %v609
  %v611 = vpop.f32.mrf.mxu0
  %v612 = vadd.f32 0.0, %v611
  %613 = vmatmul.bf16.gmra.mxu0 %v457
  %v614 = vpop.f32.mrf.mxu0
  %v615 = vadd.f32 0.0, %v614
  %v616 = vpop.f32.mrf.mxu0
  %v617 = vadd.f32 0.0, %v616
  %618 = vmatmul.bf16.gmra.mxu0 %v458
  %v619 = vpop.f32.mrf.mxu0
  %v620 = vadd.f32 0.0, %v619
  %v621 = vpop.f32.mrf.mxu0
  %v622 = vadd.f32 0.0, %v621
  %623 = vmatmul.bf16.gmra.mxu0 %v459
  %v624 = vpop.f32.mrf.mxu0
  %v625 = vadd.f32 0.0, %v624
  %v626 = vpop.f32.mrf.mxu0
  %v627 = vadd.f32 0.0, %v626
  %628 = vmatmul.bf16.gmra.mxu0 %v460
  %v629 = vpop.f32.mrf.mxu0
  %v630 = vadd.f32 0.0, %v629
  %v631 = vpop.f32.mrf.mxu0
  %v632 = vadd.f32 0.0, %v631
  %633 = vmatmul.bf16.gmra.mxu0 %v461
  %v634 = vpop.f32.mrf.mxu0
  %v635 = vadd.f32 0.0, %v634
  %v636 = vpop.f32.mrf.mxu0
  %v637 = vadd.f32 0.0, %v636
  %638 = vmatmul.bf16.gmra.mxu0 %v462
  %v639 = vpop.f32.mrf.mxu0
  %v640 = vadd.f32 0.0, %v639
  %v641 = vpop.f32.mrf.mxu0
  %v642 = vadd.f32 0.0, %v641
  %643 = vmatmul.bf16.gmra.mxu0 %v463
  %v644 = vpop.f32.mrf.mxu0
  %v645 = vadd.f32 0.0, %v644
  %v646 = vpop.f32.mrf.mxu0
  %v647 = vadd.f32 0.0, %v646
  %648 = vmatmul.bf16.gmra.mxu0 %v464
  %v649 = vpop.f32.mrf.mxu0
  %v650 = vadd.f32 0.0, %v649
  %v651 = vpop.f32.mrf.mxu0
  %v652 = vadd.f32 0.0, %v651
  %653 = vmatmul.bf16.gmra.mxu0 %v465
  %v654 = vpop.f32.mrf.mxu0
  %v655 = vadd.f32 0.0, %v654
  %v656 = vpop.f32.mrf.mxu0
  %v657 = vadd.f32 0.0, %v656
  %658 = vmatmul.bf16.gmra.mxu0 %v466
  %v659 = vpop.f32.mrf.mxu0
  %v660 = vadd.f32 0.0, %v659
  %v661 = vpop.f32.mrf.mxu0
  %v662 = vadd.f32 0.0, %v661
  %663 = vmatmul.bf16.gmra.mxu0 %v467
  %v664 = vpop.f32.mrf.mxu0
  %v665 = vadd.f32 0.0, %v664
  %v666 = vpop.f32.mrf.mxu0
  %v667 = vadd.f32 0.0, %v666
  %668 = vdwg.mxu0
  %v669 = vpack.c.bf16 %v510, %v510
  %v670 = vpack.c.bf16 %v512, %v512
  %v671 = vpack.c.bf16 %v515, %v515
  %v672 = vpack.c.bf16 %v517, %v517
  %v673 = vpack.c.bf16 %v520, %v520
  %v674 = vpack.c.bf16 %v522, %v522
  %v675 = vpack.c.bf16 %v525, %v525
  %v676 = vpack.c.bf16 %v527, %v527
  %v677 = vpack.c.bf16 %v530, %v530
  %v678 = vpack.c.bf16 %v532, %v532
  %v679 = vpack.c.bf16 %v535, %v535
  %v680 = vpack.c.bf16 %v537, %v537
  %v681 = vpack.c.bf16 %v540, %v540
  %v682 = vpack.c.bf16 %v542, %v542
  %v683 = vpack.c.bf16 %v545, %v545
  %v684 = vpack.c.bf16 %v547, %v547
  %v685 = vpack.c.bf16 %v550, %v550
  %v686 = vpack.c.bf16 %v552, %v552
  %v687 = vpack.c.bf16 %v555, %v555
  %v688 = vpack.c.bf16 %v557, %v557
  %v689 = vpack.c.bf16 %v560, %v560
  %v690 = vpack.c.bf16 %v562, %v562
  %v691 = vpack.c.bf16 %v565, %v565
  %v692 = vpack.c.bf16 %v567, %v567
  %v693 = vpack.c.bf16 %v570, %v570
  %v694 = vpack.c.bf16 %v572, %v572
  %v695 = vpack.c.bf16 %v575, %v575
  %v696 = vpack.c.bf16 %v577, %v577
  %v697 = vpack.c.bf16 %v580, %v580
  %v698 = vpack.c.bf16 %v582, %v582
  %v699 = vpack.c.bf16 %v585, %v585
  %v700 = vpack.c.bf16 %v587, %v587
  %v701 = vpack.c.bf16 %v590, %v590
  %v702 = vpack.c.bf16 %v592, %v592
  %v703 = vpack.c.bf16 %v595, %v595
  %v704 = vpack.c.bf16 %v597, %v597
  %v705 = vpack.c.bf16 %v600, %v600
  %v706 = vpack.c.bf16 %v602, %v602
  %v707 = vpack.c.bf16 %v605, %v605
  %v708 = vpack.c.bf16 %v607, %v607
  %v709 = vpack.c.bf16 %v610, %v610
  %v710 = vpack.c.bf16 %v612, %v612
  %v711 = vpack.c.bf16 %v615, %v615
  %v712 = vpack.c.bf16 %v617, %v617
  %v713 = vpack.c.bf16 %v620, %v620
  %v714 = vpack.c.bf16 %v622, %v622
  %v715 = vpack.c.bf16 %v625, %v625
  %v716 = vpack.c.bf16 %v627, %v627
  %v717 = vpack.c.bf16 %v630, %v630
  %v718 = vpack.c.bf16 %v632, %v632
  %v719 = vpack.c.bf16 %v635, %v635
  %v720 = vpack.c.bf16 %v637, %v637
  %v721 = vpack.c.bf16 %v640, %v640
  %v722 = vpack.c.bf16 %v642, %v642
  %v723 = vpack.c.bf16 %v645, %v645
  %v724 = vpack.c.bf16 %v647, %v647
  %v725 = vpack.c.bf16 %v650, %v650
  %v726 = vpack.c.bf16 %v652, %v652
  %v727 = vpack.c.bf16 %v655, %v655
  %v728 = vpack.c.bf16 %v657, %v657
  %v729 = vpack.c.bf16 %v660, %v660
  %v730 = vpack.c.bf16 %v662, %v662
  %v731 = vpack.c.bf16 %v665, %v665
  %v732 = vpack.c.bf16 %v667, %v667
  %v737 = vunpack.c.l.b16 %v669
  %v738 = vunpack.c.l.b16 %v670
  %v739 = vunpack.c.l.b16 %v671
  %v740 = vunpack.c.l.b16 %v672
  %v741 = vpack.c.b16 %v738, %v737
  %v742 = vpack.c.b16 %v740, %v739
  %v749 = vunpack.c.l.b16 %v673
  %v750 = vunpack.c.l.b16 %v674
  %v751 = vunpack.c.l.b16 %v675
  %v752 = vunpack.c.l.b16 %v676
  %v753 = vpack.c.b16 %v750, %v749
  %v754 = vpack.c.b16 %v752, %v751
  %v761 = vunpack.c.l.b16 %v677
  %v762 = vunpack.c.l.b16 %v678
  %v763 = vunpack.c.l.b16 %v679
  %v764 = vunpack.c.l.b16 %v680
  %v765 = vpack.c.b16 %v762, %v761
  %v766 = vpack.c.b16 %v764, %v763
  %v773 = vunpack.c.l.b16 %v681
  %v774 = vunpack.c.l.b16 %v682
  %v775 = vunpack.c.l.b16 %v683
  %v776 = vunpack.c.l.b16 %v684
  %v777 = vpack.c.b16 %v774, %v773
  %v778 = vpack.c.b16 %v776, %v775
  %v785 = vunpack.c.l.b16 %v685
  %v786 = vunpack.c.l.b16 %v686
  %v787 = vunpack.c.l.b16 %v687
  %v788 = vunpack.c.l.b16 %v688
  %v789 = vpack.c.b16 %v786, %v785
  %v790 = vpack.c.b16 %v788, %v787
  %v797 = vunpack.c.l.b16 %v689
  %v798 = vunpack.c.l.b16 %v690
  %v799 = vunpack.c.l.b16 %v691
  %v800 = vunpack.c.l.b16 %v692
  %v801 = vpack.c.b16 %v798, %v797
  %v802 = vpack.c.b16 %v800, %v799
  %v809 = vunpack.c.l.b16 %v693
  %v810 = vunpack.c.l.b16 %v694
  %v811 = vunpack.c.l.b16 %v695
  %v812 = vunpack.c.l.b16 %v696
  %v813 = vpack.c.b16 %v810, %v809
  %v814 = vpack.c.b16 %v812, %v811
  %v821 = vunpack.c.l.b16 %v697
  %v822 = vunpack.c.l.b16 %v698
  %v823 = vunpack.c.l.b16 %v699
  %v824 = vunpack.c.l.b16 %v700
  %v825 = vpack.c.b16 %v822, %v821
  %v826 = vpack.c.b16 %v824, %v823
  %v833 = vunpack.c.l.b16 %v701
  %v834 = vunpack.c.l.b16 %v702
  %v835 = vunpack.c.l.b16 %v703
  %v836 = vunpack.c.l.b16 %v704
  %v837 = vpack.c.b16 %v834, %v833
  %v838 = vpack.c.b16 %v836, %v835
  %v845 = vunpack.c.l.b16 %v705
  %v846 = vunpack.c.l.b16 %v706
  %v847 = vunpack.c.l.b16 %v707
  %v848 = vunpack.c.l.b16 %v708
  %v849 = vpack.c.b16 %v846, %v845
  %v850 = vpack.c.b16 %v848, %v847
  %v857 = vunpack.c.l.b16 %v709
  %v858 = vunpack.c.l.b16 %v710
  %v859 = vunpack.c.l.b16 %v711
  %v860 = vunpack.c.l.b16 %v712
  %v861 = vpack.c.b16 %v858, %v857
  %v862 = vpack.c.b16 %v860, %v859
  %v869 = vunpack.c.l.b16 %v713
  %v870 = vunpack.c.l.b16 %v714
  %v871 = vunpack.c.l.b16 %v715
  %v872 = vunpack.c.l.b16 %v716
  %v873 = vpack.c.b16 %v870, %v869
  %v874 = vpack.c.b16 %v872, %v871
  %v881 = vunpack.c.l.b16 %v717
  %v882 = vunpack.c.l.b16 %v718
  %v883 = vunpack.c.l.b16 %v719
  %v884 = vunpack.c.l.b16 %v720
  %v885 = vpack.c.b16 %v882, %v881
  %v886 = vpack.c.b16 %v884, %v883
  %v893 = vunpack.c.l.b16 %v721
  %v894 = vunpack.c.l.b16 %v722
  %v895 = vunpack.c.l.b16 %v723
  %v896 = vunpack.c.l.b16 %v724
  %v897 = vpack.c.b16 %v894, %v893
  %v898 = vpack.c.b16 %v896, %v895
  %v905 = vunpack.c.l.b16 %v725
  %v906 = vunpack.c.l.b16 %v726
  %v907 = vunpack.c.l.b16 %v727
  %v908 = vunpack.c.l.b16 %v728
  %v909 = vpack.c.b16 %v906, %v905
  %v910 = vpack.c.b16 %v908, %v907
  %v917 = vunpack.c.l.b16 %v729
  %v918 = vunpack.c.l.b16 %v730
  %v919 = vunpack.c.l.b16 %v731
  %v920 = vunpack.c.l.b16 %v732
  %v921 = vpack.c.b16 %v918, %v917
  %v922 = vpack.c.b16 %v920, %v919
  %v925 = vld [vmem:[%s4] sm:$0xf]
  %v926 = vld [vmem:[%s4 + $0x4] sm:$0xf]
  %v927 = vld [vmem:[%s4 + $0x8] sm:$0xf]
  %v928 = vld [vmem:[%s4 + $0xc] sm:$0xf]
  %v929 = vld [vmem:[%s4 + $0x10] sm:$0xf]
  %v930 = vld [vmem:[%s4 + $0x14] sm:$0xf]
  %v931 = vld [vmem:[%s4 + $0x18] sm:$0xf]
  %v932 = vld [vmem:[%s4 + $0x1c] sm:$0xf]
  %v933 = vld [vmem:[%s4 + $0x20] sm:$0xf]
  %v934 = vld [vmem:[%s4 + $0x24] sm:$0xf]
  %v935 = vld [vmem:[%s4 + $0x28] sm:$0xf]
  %v936 = vld [vmem:[%s4 + $0x2c] sm:$0xf]
  %v937 = vld [vmem:[%s4 + $0x30] sm:$0xf]
  %v938 = vld [vmem:[%s4 + $0x34] sm:$0xf]
  %v939 = vld [vmem:[%s4 + $0x38] sm:$0xf]
  %v940 = vld [vmem:[%s4 + $0x3c] sm:$0xf]
  %v941 = vld [vmem:[%s4 + $0x40] sm:$0xf]
  %v942 = vld [vmem:[%s4 + $0x44] sm:$0xf]
  %v943 = vld [vmem:[%s4 + $0x48] sm:$0xf]
  %v944 = vld [vmem:[%s4 + $0x4c] sm:$0xf]
  %v945 = vld [vmem:[%s4 + $0x50] sm:$0xf]
  %v946 = vld [vmem:[%s4 + $0x54] sm:$0xf]
  %v947 = vld [vmem:[%s4 + $0x58] sm:$0xf]
  %v948 = vld [vmem:[%s4 + $0x5c] sm:$0xf]
  %v949 = vld [vmem:[%s4 + $0x60] sm:$0xf]
  %v950 = vld [vmem:[%s4 + $0x64] sm:$0xf]
  %v951 = vld [vmem:[%s4 + $0x68] sm:$0xf]
  %v952 = vld [vmem:[%s4 + $0x6c] sm:$0xf]
  %v953 = vld [vmem:[%s4 + $0x70] sm:$0xf]
  %v954 = vld [vmem:[%s4 + $0x74] sm:$0xf]
  %v955 = vld [vmem:[%s4 + $0x78] sm:$0xf]
  %v956 = vld [vmem:[%s4 + $0x7c] sm:$0xf]
  %v957 = vld [vmem:[%s4 + $0x80] sm:$0xf]
  %v958 = vld [vmem:[%s4 + $0x84] sm:$0xf]
  %v959 = vld [vmem:[%s4 + $0x88] sm:$0xf]
  %v960 = vld [vmem:[%s4 + $0x8c] sm:$0xf]
  %v961 = vld [vmem:[%s4 + $0x90] sm:$0xf]
  %v962 = vld [vmem:[%s4 + $0x94] sm:$0xf]
  %v963 = vld [vmem:[%s4 + $0x98] sm:$0xf]
  %v964 = vld [vmem:[%s4 + $0x9c] sm:$0xf]
  %v965 = vld [vmem:[%s4 + $0xa0] sm:$0xf]
  %v966 = vld [vmem:[%s4 + $0xa4] sm:$0xf]
  %v967 = vld [vmem:[%s4 + $0xa8] sm:$0xf]
  %v968 = vld [vmem:[%s4 + $0xac] sm:$0xf]
  %v969 = vld [vmem:[%s4 + $0xb0] sm:$0xf]
  %v970 = vld [vmem:[%s4 + $0xb4] sm:$0xf]
  %v971 = vld [vmem:[%s4 + $0xb8] sm:$0xf]
  %v972 = vld [vmem:[%s4 + $0xbc] sm:$0xf]
  %v973 = vld [vmem:[%s4 + $0xc0] sm:$0xf]
  %v974 = vld [vmem:[%s4 + $0xc4] sm:$0xf]
  %v975 = vld [vmem:[%s4 + $0xc8] sm:$0xf]
  %v976 = vld [vmem:[%s4 + $0xcc] sm:$0xf]
  %v977 = vld [vmem:[%s4 + $0xd0] sm:$0xf]
  %v978 = vld [vmem:[%s4 + $0xd4] sm:$0xf]
  %v979 = vld [vmem:[%s4 + $0xd8] sm:$0xf]
  %v980 = vld [vmem:[%s4 + $0xdc] sm:$0xf]
  %v981 = vld [vmem:[%s4 + $0xe0] sm:$0xf]
  %v982 = vld [vmem:[%s4 + $0xe4] sm:$0xf]
  %v983 = vld [vmem:[%s4 + $0xe8] sm:$0xf]
  %v984 = vld [vmem:[%s4 + $0xec] sm:$0xf]
  %v985 = vld [vmem:[%s4 + $0xf0] sm:$0xf]
  %v986 = vld [vmem:[%s4 + $0xf4] sm:$0xf]
  %v987 = vld [vmem:[%s4 + $0xf8] sm:$0xf]
  %v988 = vld [vmem:[%s4 + $0xfc] sm:$0xf]
  %v989 = vld [vmem:[%s4 + $0x100] sm:$0xf]
  %v990 = vld [vmem:[%s4 + $0x104] sm:$0xf]
  %v991 = vld [vmem:[%s4 + $0x108] sm:$0xf]
  %v992 = vld [vmem:[%s4 + $0x10c] sm:$0xf]
  %v993 = vld [vmem:[%s4 + $0x110] sm:$0xf]
  %v994 = vld [vmem:[%s4 + $0x114] sm:$0xf]
  %v995 = vld [vmem:[%s4 + $0x118] sm:$0xf]
  %v996 = vld [vmem:[%s4 + $0x11c] sm:$0xf]
  %v997 = vld [vmem:[%s4 + $0x120] sm:$0xf]
  %v998 = vld [vmem:[%s4 + $0x124] sm:$0xf]
  %v999 = vld [vmem:[%s4 + $0x128] sm:$0xf]
  %v1000 = vld [vmem:[%s4 + $0x12c] sm:$0xf]
  %v1001 = vld [vmem:[%s4 + $0x130] sm:$0xf]
  %v1002 = vld [vmem:[%s4 + $0x134] sm:$0xf]
  %v1003 = vld [vmem:[%s4 + $0x138] sm:$0xf]
  %v1004 = vld [vmem:[%s4 + $0x13c] sm:$0xf]
  %v1005 = vld [vmem:[%s4 + $0x140] sm:$0xf]
  %v1006 = vld [vmem:[%s4 + $0x144] sm:$0xf]
  %v1007 = vld [vmem:[%s4 + $0x148] sm:$0xf]
  %v1008 = vld [vmem:[%s4 + $0x14c] sm:$0xf]
  %v1009 = vld [vmem:[%s4 + $0x150] sm:$0xf]
  %v1010 = vld [vmem:[%s4 + $0x154] sm:$0xf]
  %v1011 = vld [vmem:[%s4 + $0x158] sm:$0xf]
  %v1012 = vld [vmem:[%s4 + $0x15c] sm:$0xf]
  %v1013 = vld [vmem:[%s4 + $0x160] sm:$0xf]
  %v1014 = vld [vmem:[%s4 + $0x164] sm:$0xf]
  %v1015 = vld [vmem:[%s4 + $0x168] sm:$0xf]
  %v1016 = vld [vmem:[%s4 + $0x16c] sm:$0xf]
  %v1017 = vld [vmem:[%s4 + $0x170] sm:$0xf]
  %v1018 = vld [vmem:[%s4 + $0x174] sm:$0xf]
  %v1019 = vld [vmem:[%s4 + $0x178] sm:$0xf]
  %v1020 = vld [vmem:[%s4 + $0x17c] sm:$0xf]
  %v1021 = vld [vmem:[%s4 + $0x180] sm:$0xf]
  %v1022 = vld [vmem:[%s4 + $0x184] sm:$0xf]
  %v1023 = vld [vmem:[%s4 + $0x188] sm:$0xf]
  %v1024 = vld [vmem:[%s4 + $0x18c] sm:$0xf]
  %v1025 = vld [vmem:[%s4 + $0x190] sm:$0xf]
  %v1026 = vld [vmem:[%s4 + $0x194] sm:$0xf]
  %v1027 = vld [vmem:[%s4 + $0x198] sm:$0xf]
  %v1028 = vld [vmem:[%s4 + $0x19c] sm:$0xf]
  %v1029 = vld [vmem:[%s4 + $0x1a0] sm:$0xf]
  %v1030 = vld [vmem:[%s4 + $0x1a4] sm:$0xf]
  %v1031 = vld [vmem:[%s4 + $0x1a8] sm:$0xf]
  %v1032 = vld [vmem:[%s4 + $0x1ac] sm:$0xf]
  %v1033 = vld [vmem:[%s4 + $0x1b0] sm:$0xf]
  %v1034 = vld [vmem:[%s4 + $0x1b4] sm:$0xf]
  %v1035 = vld [vmem:[%s4 + $0x1b8] sm:$0xf]
  %v1036 = vld [vmem:[%s4 + $0x1bc] sm:$0xf]
  %v1037 = vld [vmem:[%s4 + $0x1c0] sm:$0xf]
  %v1038 = vld [vmem:[%s4 + $0x1c4] sm:$0xf]
  %v1039 = vld [vmem:[%s4 + $0x1c8] sm:$0xf]
  %v1040 = vld [vmem:[%s4 + $0x1cc] sm:$0xf]
  %v1041 = vld [vmem:[%s4 + $0x1d0] sm:$0xf]
  %v1042 = vld [vmem:[%s4 + $0x1d4] sm:$0xf]
  %v1043 = vld [vmem:[%s4 + $0x1d8] sm:$0xf]
  %v1044 = vld [vmem:[%s4 + $0x1dc] sm:$0xf]
  %v1045 = vld [vmem:[%s4 + $0x1e0] sm:$0xf]
  %v1046 = vld [vmem:[%s4 + $0x1e4] sm:$0xf]
  %v1047 = vld [vmem:[%s4 + $0x1e8] sm:$0xf]
  %v1048 = vld [vmem:[%s4 + $0x1ec] sm:$0xf]
  %v1049 = vld [vmem:[%s4 + $0x1f0] sm:$0xf]
  %v1050 = vld [vmem:[%s4 + $0x1f4] sm:$0xf]
  %v1051 = vld [vmem:[%s4 + $0x1f8] sm:$0xf]
  %v1052 = vld [vmem:[%s4 + $0x1fc] sm:$0xf]
  %v1053 = vld [vmem:[%s4 + $0x200] sm:$0xf]
  %v1054 = vld [vmem:[%s4 + $0x204] sm:$0xf]
  %v1055 = vld [vmem:[%s4 + $0x208] sm:$0xf]
  %v1056 = vld [vmem:[%s4 + $0x20c] sm:$0xf]
  %v1057 = vld [vmem:[%s4 + $0x210] sm:$0xf]
  %v1058 = vld [vmem:[%s4 + $0x214] sm:$0xf]
  %v1059 = vld [vmem:[%s4 + $0x218] sm:$0xf]
  %v1060 = vld [vmem:[%s4 + $0x21c] sm:$0xf]
  %v1061 = vld [vmem:[%s4 + $0x220] sm:$0xf]
  %v1062 = vld [vmem:[%s4 + $0x224] sm:$0xf]
  %v1063 = vld [vmem:[%s4 + $0x228] sm:$0xf]
  %v1064 = vld [vmem:[%s4 + $0x22c] sm:$0xf]
  %v1065 = vld [vmem:[%s4 + $0x230] sm:$0xf]
  %v1066 = vld [vmem:[%s4 + $0x234] sm:$0xf]
  %v1067 = vld [vmem:[%s4 + $0x238] sm:$0xf]
  %v1068 = vld [vmem:[%s4 + $0x23c] sm:$0xf]
  %v1069 = vld [vmem:[%s4 + $0x240] sm:$0xf]
  %v1070 = vld [vmem:[%s4 + $0x244] sm:$0xf]
  %v1071 = vld [vmem:[%s4 + $0x248] sm:$0xf]
  %v1072 = vld [vmem:[%s4 + $0x24c] sm:$0xf]
  %v1073 = vld [vmem:[%s4 + $0x250] sm:$0xf]
  %v1074 = vld [vmem:[%s4 + $0x254] sm:$0xf]
  %v1075 = vld [vmem:[%s4 + $0x258] sm:$0xf]
  %v1076 = vld [vmem:[%s4 + $0x25c] sm:$0xf]
  %v1077 = vld [vmem:[%s4 + $0x260] sm:$0xf]
  %v1078 = vld [vmem:[%s4 + $0x264] sm:$0xf]
  %v1079 = vld [vmem:[%s4 + $0x268] sm:$0xf]
  %v1080 = vld [vmem:[%s4 + $0x26c] sm:$0xf]
  %v1081 = vld [vmem:[%s4 + $0x270] sm:$0xf]
  %v1082 = vld [vmem:[%s4 + $0x274] sm:$0xf]
  %v1083 = vld [vmem:[%s4 + $0x278] sm:$0xf]
  %v1084 = vld [vmem:[%s4 + $0x27c] sm:$0xf]
  %v1085 = vld [vmem:[%s4 + $0x280] sm:$0xf]
  %v1086 = vld [vmem:[%s4 + $0x284] sm:$0xf]
  %v1087 = vld [vmem:[%s4 + $0x288] sm:$0xf]
  %v1088 = vld [vmem:[%s4 + $0x28c] sm:$0xf]
  %v1089 = vld [vmem:[%s4 + $0x290] sm:$0xf]
  %v1090 = vld [vmem:[%s4 + $0x294] sm:$0xf]
  %v1091 = vld [vmem:[%s4 + $0x298] sm:$0xf]
  %v1092 = vld [vmem:[%s4 + $0x29c] sm:$0xf]
  %v1093 = vld [vmem:[%s4 + $0x2a0] sm:$0xf]
  %v1094 = vld [vmem:[%s4 + $0x2a4] sm:$0xf]
  %v1095 = vld [vmem:[%s4 + $0x2a8] sm:$0xf]
  %v1096 = vld [vmem:[%s4 + $0x2ac] sm:$0xf]
  %v1097 = vld [vmem:[%s4 + $0x2b0] sm:$0xf]
  %v1098 = vld [vmem:[%s4 + $0x2b4] sm:$0xf]
  %v1099 = vld [vmem:[%s4 + $0x2b8] sm:$0xf]
  %v1100 = vld [vmem:[%s4 + $0x2bc] sm:$0xf]
  %v1101 = vld [vmem:[%s4 + $0x2c0] sm:$0xf]
  %v1102 = vld [vmem:[%s4 + $0x2c4] sm:$0xf]
  %v1103 = vld [vmem:[%s4 + $0x2c8] sm:$0xf]
  %v1104 = vld [vmem:[%s4 + $0x2cc] sm:$0xf]
  %v1105 = vld [vmem:[%s4 + $0x2d0] sm:$0xf]
  %v1106 = vld [vmem:[%s4 + $0x2d4] sm:$0xf]
  %v1107 = vld [vmem:[%s4 + $0x2d8] sm:$0xf]
  %v1108 = vld [vmem:[%s4 + $0x2dc] sm:$0xf]
  %v1109 = vld [vmem:[%s4 + $0x2e0] sm:$0xf]
  %v1110 = vld [vmem:[%s4 + $0x2e4] sm:$0xf]
  %v1111 = vld [vmem:[%s4 + $0x2e8] sm:$0xf]
  %v1112 = vld [vmem:[%s4 + $0x2ec] sm:$0xf]
  %v1113 = vld [vmem:[%s4 + $0x2f0] sm:$0xf]
  %v1114 = vld [vmem:[%s4 + $0x2f4] sm:$0xf]
  %v1115 = vld [vmem:[%s4 + $0x2f8] sm:$0xf]
  %v1116 = vld [vmem:[%s4 + $0x2fc] sm:$0xf]
  %v1117 = vld [vmem:[%s4 + $0x300] sm:$0xf]
  %v1118 = vld [vmem:[%s4 + $0x304] sm:$0xf]
  %v1119 = vld [vmem:[%s4 + $0x308] sm:$0xf]
  %v1120 = vld [vmem:[%s4 + $0x30c] sm:$0xf]
  %v1121 = vld [vmem:[%s4 + $0x310] sm:$0xf]
  %v1122 = vld [vmem:[%s4 + $0x314] sm:$0xf]
  %v1123 = vld [vmem:[%s4 + $0x318] sm:$0xf]
  %v1124 = vld [vmem:[%s4 + $0x31c] sm:$0xf]
  %v1125 = vld [vmem:[%s4 + $0x320] sm:$0xf]
  %v1126 = vld [vmem:[%s4 + $0x324] sm:$0xf]
  %v1127 = vld [vmem:[%s4 + $0x328] sm:$0xf]
  %v1128 = vld [vmem:[%s4 + $0x32c] sm:$0xf]
  %v1129 = vld [vmem:[%s4 + $0x330] sm:$0xf]
  %v1130 = vld [vmem:[%s4 + $0x334] sm:$0xf]
  %v1131 = vld [vmem:[%s4 + $0x338] sm:$0xf]
  %v1132 = vld [vmem:[%s4 + $0x33c] sm:$0xf]
  %v1133 = vld [vmem:[%s4 + $0x340] sm:$0xf]
  %v1134 = vld [vmem:[%s4 + $0x344] sm:$0xf]
  %v1135 = vld [vmem:[%s4 + $0x348] sm:$0xf]
  %v1136 = vld [vmem:[%s4 + $0x34c] sm:$0xf]
  %v1137 = vld [vmem:[%s4 + $0x350] sm:$0xf]
  %v1138 = vld [vmem:[%s4 + $0x354] sm:$0xf]
  %v1139 = vld [vmem:[%s4 + $0x358] sm:$0xf]
  %v1140 = vld [vmem:[%s4 + $0x35c] sm:$0xf]
  %v1141 = vld [vmem:[%s4 + $0x360] sm:$0xf]
  %v1142 = vld [vmem:[%s4 + $0x364] sm:$0xf]
  %v1143 = vld [vmem:[%s4 + $0x368] sm:$0xf]
  %v1144 = vld [vmem:[%s4 + $0x36c] sm:$0xf]
  %v1145 = vld [vmem:[%s4 + $0x370] sm:$0xf]
  %v1146 = vld [vmem:[%s4 + $0x374] sm:$0xf]
  %v1147 = vld [vmem:[%s4 + $0x378] sm:$0xf]
  %v1148 = vld [vmem:[%s4 + $0x37c] sm:$0xf]
  %v1149 = vld [vmem:[%s4 + $0x380] sm:$0xf]
  %v1150 = vld [vmem:[%s4 + $0x384] sm:$0xf]
  %v1151 = vld [vmem:[%s4 + $0x388] sm:$0xf]
  %v1152 = vld [vmem:[%s4 + $0x38c] sm:$0xf]
  %v1153 = vld [vmem:[%s4 + $0x390] sm:$0xf]
  %v1154 = vld [vmem:[%s4 + $0x394] sm:$0xf]
  %v1155 = vld [vmem:[%s4 + $0x398] sm:$0xf]
  %v1156 = vld [vmem:[%s4 + $0x39c] sm:$0xf]
  %v1157 = vld [vmem:[%s4 + $0x3a0] sm:$0xf]
  %v1158 = vld [vmem:[%s4 + $0x3a4] sm:$0xf]
  %v1159 = vld [vmem:[%s4 + $0x3a8] sm:$0xf]
  %v1160 = vld [vmem:[%s4 + $0x3ac] sm:$0xf]
  %v1161 = vld [vmem:[%s4 + $0x3b0] sm:$0xf]
  %v1162 = vld [vmem:[%s4 + $0x3b4] sm:$0xf]
  %v1163 = vld [vmem:[%s4 + $0x3b8] sm:$0xf]
  %v1164 = vld [vmem:[%s4 + $0x3bc] sm:$0xf]
  %v1165 = vld [vmem:[%s4 + $0x3c0] sm:$0xf]
  %v1166 = vld [vmem:[%s4 + $0x3c4] sm:$0xf]
  %v1167 = vld [vmem:[%s4 + $0x3c8] sm:$0xf]
  %v1168 = vld [vmem:[%s4 + $0x3cc] sm:$0xf]
  %v1169 = vld [vmem:[%s4 + $0x3d0] sm:$0xf]
  %v1170 = vld [vmem:[%s4 + $0x3d4] sm:$0xf]
  %v1171 = vld [vmem:[%s4 + $0x3d8] sm:$0xf]
  %v1172 = vld [vmem:[%s4 + $0x3dc] sm:$0xf]
  %v1173 = vld [vmem:[%s4 + $0x3e0] sm:$0xf]
  %v1174 = vld [vmem:[%s4 + $0x3e4] sm:$0xf]
  %v1175 = vld [vmem:[%s4 + $0x3e8] sm:$0xf]
  %v1176 = vld [vmem:[%s4 + $0x3ec] sm:$0xf]
  %v1177 = vld [vmem:[%s4 + $0x3f0] sm:$0xf]
  %v1178 = vld [vmem:[%s4 + $0x3f4] sm:$0xf]
  %v1179 = vld [vmem:[%s4 + $0x3f8] sm:$0xf]
  %v1180 = vld [vmem:[%s4 + $0x3fc] sm:$0xf]
  %v1437 = vunpack.c.l.b16 %v925
  %v1438 = vunpack.c.l.b16 %v926
  %v1439 = vunpack.c.l.b16 %v927
  %v1440 = vunpack.c.l.b16 %v928
  %v1441 = vunpack.c.l.b16 %v929
  %v1442 = vunpack.c.l.b16 %v930
  %v1443 = vunpack.c.l.b16 %v931
  %v1444 = vunpack.c.l.b16 %v932
  %v1445 = vunpack.c.l.b16 %v933
  %v1446 = vunpack.c.l.b16 %v934
  %v1447 = vunpack.c.l.b16 %v935
  %v1448 = vunpack.c.l.b16 %v936
  %v1449 = vunpack.c.l.b16 %v937
  %v1450 = vunpack.c.l.b16 %v938
  %v1451 = vunpack.c.l.b16 %v939
  %v1452 = vunpack.c.l.b16 %v940
  %v1453 = vunpack.c.l.b16 %v941
  %v1454 = vunpack.c.l.b16 %v942
  %v1455 = vunpack.c.l.b16 %v943
  %v1456 = vunpack.c.l.b16 %v944
  %v1457 = vunpack.c.l.b16 %v945
  %v1458 = vunpack.c.l.b16 %v946
  %v1459 = vunpack.c.l.b16 %v947
  %v1460 = vunpack.c.l.b16 %v948
  %v1461 = vunpack.c.l.b16 %v949
  %v1462 = vunpack.c.l.b16 %v950
  %v1463 = vunpack.c.l.b16 %v951
  %v1464 = vunpack.c.l.b16 %v952
  %v1465 = vunpack.c.l.b16 %v953
  %v1466 = vunpack.c.l.b16 %v954
  %v1467 = vunpack.c.l.b16 %v955
  %v1468 = vunpack.c.l.b16 %v956
  %v1469 = vunpack.c.l.b16 %v957
  %v1470 = vunpack.c.l.b16 %v958
  %v1471 = vunpack.c.l.b16 %v959
  %v1472 = vunpack.c.l.b16 %v960
  %v1473 = vunpack.c.l.b16 %v961
  %v1474 = vunpack.c.l.b16 %v962
  %v1475 = vunpack.c.l.b16 %v963
  %v1476 = vunpack.c.l.b16 %v964
  %v1477 = vunpack.c.l.b16 %v965
  %v1478 = vunpack.c.l.b16 %v966
  %v1479 = vunpack.c.l.b16 %v967
  %v1480 = vunpack.c.l.b16 %v968
  %v1481 = vunpack.c.l.b16 %v969
  %v1482 = vunpack.c.l.b16 %v970
  %v1483 = vunpack.c.l.b16 %v971
  %v1484 = vunpack.c.l.b16 %v972
  %v1485 = vunpack.c.l.b16 %v973
  %v1486 = vunpack.c.l.b16 %v974
  %v1487 = vunpack.c.l.b16 %v975
  %v1488 = vunpack.c.l.b16 %v976
  %v1489 = vunpack.c.l.b16 %v977
  %v1490 = vunpack.c.l.b16 %v978
  %v1491 = vunpack.c.l.b16 %v979
  %v1492 = vunpack.c.l.b16 %v980
  %v1493 = vunpack.c.l.b16 %v981
  %v1494 = vunpack.c.l.b16 %v982
  %v1495 = vunpack.c.l.b16 %v983
  %v1496 = vunpack.c.l.b16 %v984
  %v1497 = vunpack.c.l.b16 %v985
  %v1498 = vunpack.c.l.b16 %v986
  %v1499 = vunpack.c.l.b16 %v987
  %v1500 = vunpack.c.l.b16 %v988
  %v1501 = vunpack.c.l.b16 %v989
  %v1502 = vunpack.c.l.b16 %v990
  %v1503 = vunpack.c.l.b16 %v991
  %v1504 = vunpack.c.l.b16 %v992
  %v1505 = vunpack.c.l.b16 %v993
  %v1506 = vunpack.c.l.b16 %v994
  %v1507 = vunpack.c.l.b16 %v995
  %v1508 = vunpack.c.l.b16 %v996
  %v1509 = vunpack.c.l.b16 %v997
  %v1510 = vunpack.c.l.b16 %v998
  %v1511 = vunpack.c.l.b16 %v999
  %v1512 = vunpack.c.l.b16 %v1000
  %v1513 = vunpack.c.l.b16 %v1001
  %v1514 = vunpack.c.l.b16 %v1002
  %v1515 = vunpack.c.l.b16 %v1003
  %v1516 = vunpack.c.l.b16 %v1004
  %v1517 = vunpack.c.l.b16 %v1005
  %v1518 = vunpack.c.l.b16 %v1006
  %v1519 = vunpack.c.l.b16 %v1007
  %v1520 = vunpack.c.l.b16 %v1008
  %v1521 = vunpack.c.l.b16 %v1009
  %v1522 = vunpack.c.l.b16 %v1010
  %v1523 = vunpack.c.l.b16 %v1011
  %v1524 = vunpack.c.l.b16 %v1012
  %v1525 = vunpack.c.l.b16 %v1013
  %v1526 = vunpack.c.l.b16 %v1014
  %v1527 = vunpack.c.l.b16 %v1015
  %v1528 = vunpack.c.l.b16 %v1016
  %v1529 = vunpack.c.l.b16 %v1017
  %v1530 = vunpack.c.l.b16 %v1018
  %v1531 = vunpack.c.l.b16 %v1019
  %v1532 = vunpack.c.l.b16 %v1020
  %v1533 = vunpack.c.l.b16 %v1021
  %v1534 = vunpack.c.l.b16 %v1022
  %v1535 = vunpack.c.l.b16 %v1023
  %v1536 = vunpack.c.l.b16 %v1024
  %v1537 = vunpack.c.l.b16 %v1025
  %v1538 = vunpack.c.l.b16 %v1026
  %v1539 = vunpack.c.l.b16 %v1027
  %v1540 = vunpack.c.l.b16 %v1028
  %v1541 = vunpack.c.l.b16 %v1029
  %v1542 = vunpack.c.l.b16 %v1030
  %v1543 = vunpack.c.l.b16 %v1031
  %v1544 = vunpack.c.l.b16 %v1032
  %v1545 = vunpack.c.l.b16 %v1033
  %v1546 = vunpack.c.l.b16 %v1034
  %v1547 = vunpack.c.l.b16 %v1035
  %v1548 = vunpack.c.l.b16 %v1036
  %v1549 = vunpack.c.l.b16 %v1037
  %v1550 = vunpack.c.l.b16 %v1038
  %v1551 = vunpack.c.l.b16 %v1039
  %v1552 = vunpack.c.l.b16 %v1040
  %v1553 = vunpack.c.l.b16 %v1041
  %v1554 = vunpack.c.l.b16 %v1042
  %v1555 = vunpack.c.l.b16 %v1043
  %v1556 = vunpack.c.l.b16 %v1044
  %v1557 = vunpack.c.l.b16 %v1045
  %v1558 = vunpack.c.l.b16 %v1046
  %v1559 = vunpack.c.l.b16 %v1047
  %v1560 = vunpack.c.l.b16 %v1048
  %v1561 = vunpack.c.l.b16 %v1049
  %v1562 = vunpack.c.l.b16 %v1050
  %v1563 = vunpack.c.l.b16 %v1051
  %v1564 = vunpack.c.l.b16 %v1052
  %v1565 = vunpack.c.l.b16 %v1053
  %v1566 = vunpack.c.l.b16 %v1054
  %v1567 = vunpack.c.l.b16 %v1055
  %v1568 = vunpack.c.l.b16 %v1056
  %v1569 = vunpack.c.l.b16 %v1057
  %v1570 = vunpack.c.l.b16 %v1058
  %v1571 = vunpack.c.l.b16 %v1059
  %v1572 = vunpack.c.l.b16 %v1060
  %v1573 = vunpack.c.l.b16 %v1061
  %v1574 = vunpack.c.l.b16 %v1062
  %v1575 = vunpack.c.l.b16 %v1063
  %v1576 = vunpack.c.l.b16 %v1064
  %v1577 = vunpack.c.l.b16 %v1065
  %v1578 = vunpack.c.l.b16 %v1066
  %v1579 = vunpack.c.l.b16 %v1067
  %v1580 = vunpack.c.l.b16 %v1068
  %v1581 = vunpack.c.l.b16 %v1069
  %v1582 = vunpack.c.l.b16 %v1070
  %v1583 = vunpack.c.l.b16 %v1071
  %v1584 = vunpack.c.l.b16 %v1072
  %v1585 = vunpack.c.l.b16 %v1073
  %v1586 = vunpack.c.l.b16 %v1074
  %v1587 = vunpack.c.l.b16 %v1075
  %v1588 = vunpack.c.l.b16 %v1076
  %v1589 = vunpack.c.l.b16 %v1077
  %v1590 = vunpack.c.l.b16 %v1078
  %v1591 = vunpack.c.l.b16 %v1079
  %v1592 = vunpack.c.l.b16 %v1080
  %v1593 = vunpack.c.l.b16 %v1081
  %v1594 = vunpack.c.l.b16 %v1082
  %v1595 = vunpack.c.l.b16 %v1083
  %v1596 = vunpack.c.l.b16 %v1084
  %v1597 = vunpack.c.l.b16 %v1085
  %v1598 = vunpack.c.l.b16 %v1086
  %v1599 = vunpack.c.l.b16 %v1087
  %v1600 = vunpack.c.l.b16 %v1088
  %v1601 = vunpack.c.l.b16 %v1089
  %v1602 = vunpack.c.l.b16 %v1090
  %v1603 = vunpack.c.l.b16 %v1091
  %v1604 = vunpack.c.l.b16 %v1092
  %v1605 = vunpack.c.l.b16 %v1093
  %v1606 = vunpack.c.l.b16 %v1094
  %v1607 = vunpack.c.l.b16 %v1095
  %v1608 = vunpack.c.l.b16 %v1096
  %v1609 = vunpack.c.l.b16 %v1097
  %v1610 = vunpack.c.l.b16 %v1098
  %v1611 = vunpack.c.l.b16 %v1099
  %v1612 = vunpack.c.l.b16 %v1100
  %v1613 = vunpack.c.l.b16 %v1101
  %v1614 = vunpack.c.l.b16 %v1102
  %v1615 = vunpack.c.l.b16 %v1103
  %v1616 = vunpack.c.l.b16 %v1104
  %v1617 = vunpack.c.l.b16 %v1105
  %v1618 = vunpack.c.l.b16 %v1106
  %v1619 = vunpack.c.l.b16 %v1107
  %v1620 = vunpack.c.l.b16 %v1108
  %v1621 = vunpack.c.l.b16 %v1109
  %v1622 = vunpack.c.l.b16 %v1110
  %v1623 = vunpack.c.l.b16 %v1111
  %v1624 = vunpack.c.l.b16 %v1112
  %v1625 = vunpack.c.l.b16 %v1113
  %v1626 = vunpack.c.l.b16 %v1114
  %v1627 = vunpack.c.l.b16 %v1115
  %v1628 = vunpack.c.l.b16 %v1116
  %v1629 = vunpack.c.l.b16 %v1117
  %v1630 = vunpack.c.l.b16 %v1118
  %v1631 = vunpack.c.l.b16 %v1119
  %v1632 = vunpack.c.l.b16 %v1120
  %v1633 = vunpack.c.l.b16 %v1121
  %v1634 = vunpack.c.l.b16 %v1122
  %v1635 = vunpack.c.l.b16 %v1123
  %v1636 = vunpack.c.l.b16 %v1124
  %v1637 = vunpack.c.l.b16 %v1125
  %v1638 = vunpack.c.l.b16 %v1126
  %v1639 = vunpack.c.l.b16 %v1127
  %v1640 = vunpack.c.l.b16 %v1128
  %v1641 = vunpack.c.l.b16 %v1129
  %v1642 = vunpack.c.l.b16 %v1130
  %v1643 = vunpack.c.l.b16 %v1131
  %v1644 = vunpack.c.l.b16 %v1132
  %v1645 = vunpack.c.l.b16 %v1133
  %v1646 = vunpack.c.l.b16 %v1134
  %v1647 = vunpack.c.l.b16 %v1135
  %v1648 = vunpack.c.l.b16 %v1136
  %v1649 = vunpack.c.l.b16 %v1137
  %v1650 = vunpack.c.l.b16 %v1138
  %v1651 = vunpack.c.l.b16 %v1139
  %v1652 = vunpack.c.l.b16 %v1140
  %v1653 = vunpack.c.l.b16 %v1141
  %v1654 = vunpack.c.l.b16 %v1142
  %v1655 = vunpack.c.l.b16 %v1143
  %v1656 = vunpack.c.l.b16 %v1144
  %v1657 = vunpack.c.l.b16 %v1145
  %v1658 = vunpack.c.l.b16 %v1146
  %v1659 = vunpack.c.l.b16 %v1147
  %v1660 = vunpack.c.l.b16 %v1148
  %v1661 = vunpack.c.l.b16 %v1149
  %v1662 = vunpack.c.l.b16 %v1150
  %v1663 = vunpack.c.l.b16 %v1151
  %v1664 = vunpack.c.l.b16 %v1152
  %v1665 = vunpack.c.l.b16 %v1153
  %v1666 = vunpack.c.l.b16 %v1154
  %v1667 = vunpack.c.l.b16 %v1155
  %v1668 = vunpack.c.l.b16 %v1156
  %v1669 = vunpack.c.l.b16 %v1157
  %v1670 = vunpack.c.l.b16 %v1158
  %v1671 = vunpack.c.l.b16 %v1159
  %v1672 = vunpack.c.l.b16 %v1160
  %v1673 = vunpack.c.l.b16 %v1161
  %v1674 = vunpack.c.l.b16 %v1162
  %v1675 = vunpack.c.l.b16 %v1163
  %v1676 = vunpack.c.l.b16 %v1164
  %v1677 = vunpack.c.l.b16 %v1165
  %v1678 = vunpack.c.l.b16 %v1166
  %v1679 = vunpack.c.l.b16 %v1167
  %v1680 = vunpack.c.l.b16 %v1168
  %v1681 = vunpack.c.l.b16 %v1169
  %v1682 = vunpack.c.l.b16 %v1170
  %v1683 = vunpack.c.l.b16 %v1171
  %v1684 = vunpack.c.l.b16 %v1172
  %v1685 = vunpack.c.l.b16 %v1173
  %v1686 = vunpack.c.l.b16 %v1174
  %v1687 = vunpack.c.l.b16 %v1175
  %v1688 = vunpack.c.l.b16 %v1176
  %v1689 = vunpack.c.l.b16 %v1177
  %v1690 = vunpack.c.l.b16 %v1178
  %v1691 = vunpack.c.l.b16 %v1179
  %v1692 = vunpack.c.l.b16 %v1180
  %v1693 = vpack.c.b16 %v1438, %v1437
  %v1694 = vpack.c.b16 %v1440, %v1439
  %v1695 = vpack.c.b16 %v1442, %v1441
  %v1696 = vpack.c.b16 %v1444, %v1443
  %v1697 = vpack.c.b16 %v1446, %v1445
  %v1698 = vpack.c.b16 %v1448, %v1447
  %v1699 = vpack.c.b16 %v1450, %v1449
  %v1700 = vpack.c.b16 %v1452, %v1451
  %v1701 = vpack.c.b16 %v1454, %v1453
  %v1702 = vpack.c.b16 %v1456, %v1455
  %v1703 = vpack.c.b16 %v1458, %v1457
  %v1704 = vpack.c.b16 %v1460, %v1459
  %v1705 = vpack.c.b16 %v1462, %v1461
  %v1706 = vpack.c.b16 %v1464, %v1463
  %v1707 = vpack.c.b16 %v1466, %v1465
  %v1708 = vpack.c.b16 %v1468, %v1467
  %v1709 = vpack.c.b16 %v1470, %v1469
  %v1710 = vpack.c.b16 %v1472, %v1471
  %v1711 = vpack.c.b16 %v1474, %v1473
  %v1712 = vpack.c.b16 %v1476, %v1475
  %v1713 = vpack.c.b16 %v1478, %v1477
  %v1714 = vpack.c.b16 %v1480, %v1479
  %v1715 = vpack.c.b16 %v1482, %v1481
  %v1716 = vpack.c.b16 %v1484, %v1483
  %v1717 = vpack.c.b16 %v1486, %v1485
  %v1718 = vpack.c.b16 %v1488, %v1487
  %v1719 = vpack.c.b16 %v1490, %v1489
  %v1720 = vpack.c.b16 %v1492, %v1491
  %v1721 = vpack.c.b16 %v1494, %v1493
  %v1722 = vpack.c.b16 %v1496, %v1495
  %v1723 = vpack.c.b16 %v1498, %v1497
  %v1724 = vpack.c.b16 %v1500, %v1499
  %v1725 = vpack.c.b16 %v1502, %v1501
  %v1726 = vpack.c.b16 %v1504, %v1503
  %v1727 = vpack.c.b16 %v1506, %v1505
  %v1728 = vpack.c.b16 %v1508, %v1507
  %v1729 = vpack.c.b16 %v1510, %v1509
  %v1730 = vpack.c.b16 %v1512, %v1511
  %v1731 = vpack.c.b16 %v1514, %v1513
  %v1732 = vpack.c.b16 %v1516, %v1515
  %v1733 = vpack.c.b16 %v1518, %v1517
  %v1734 = vpack.c.b16 %v1520, %v1519
  %v1735 = vpack.c.b16 %v1522, %v1521
  %v1736 = vpack.c.b16 %v1524, %v1523
  %v1737 = vpack.c.b16 %v1526, %v1525
  %v1738 = vpack.c.b16 %v1528, %v1527
  %v1739 = vpack.c.b16 %v1530, %v1529
  %v1740 = vpack.c.b16 %v1532, %v1531
  %v1741 = vpack.c.b16 %v1534, %v1533
  %v1742 = vpack.c.b16 %v1536, %v1535
  %v1743 = vpack.c.b16 %v1538, %v1537
  %v1744 = vpack.c.b16 %v1540, %v1539
  %v1745 = vpack.c.b16 %v1542, %v1541
  %v1746 = vpack.c.b16 %v1544, %v1543
  %v1747 = vpack.c.b16 %v1546, %v1545
  %v1748 = vpack.c.b16 %v1548, %v1547
  %v1749 = vpack.c.b16 %v1550, %v1549
  %v1750 = vpack.c.b16 %v1552, %v1551
  %v1751 = vpack.c.b16 %v1554, %v1553
  %v1752 = vpack.c.b16 %v1556, %v1555
  %v1753 = vpack.c.b16 %v1558, %v1557
  %v1754 = vpack.c.b16 %v1560, %v1559
  %v1755 = vpack.c.b16 %v1562, %v1561
  %v1756 = vpack.c.b16 %v1564, %v1563
  %v1757 = vpack.c.b16 %v1566, %v1565
  %v1758 = vpack.c.b16 %v1568, %v1567
  %v1759 = vpack.c.b16 %v1570, %v1569
  %v1760 = vpack.c.b16 %v1572, %v1571
  %v1761 = vpack.c.b16 %v1574, %v1573
  %v1762 = vpack.c.b16 %v1576, %v1575
  %v1763 = vpack.c.b16 %v1578, %v1577
  %v1764 = vpack.c.b16 %v1580, %v1579
  %v1765 = vpack.c.b16 %v1582, %v1581
  %v1766 = vpack.c.b16 %v1584, %v1583
  %v1767 = vpack.c.b16 %v1586, %v1585
  %v1768 = vpack.c.b16 %v1588, %v1587
  %v1769 = vpack.c.b16 %v1590, %v1589
  %v1770 = vpack.c.b16 %v1592, %v1591
  %v1771 = vpack.c.b16 %v1594, %v1593
  %v1772 = vpack.c.b16 %v1596, %v1595
  %v1773 = vpack.c.b16 %v1598, %v1597
  %v1774 = vpack.c.b16 %v1600, %v1599
  %v1775 = vpack.c.b16 %v1602, %v1601
  %v1776 = vpack.c.b16 %v1604, %v1603
  %v1777 = vpack.c.b16 %v1606, %v1605
  %v1778 = vpack.c.b16 %v1608, %v1607
  %v1779 = vpack.c.b16 %v1610, %v1609
  %v1780 = vpack.c.b16 %v1612, %v1611
  %v1781 = vpack.c.b16 %v1614, %v1613
  %v1782 = vpack.c.b16 %v1616, %v1615
  %v1783 = vpack.c.b16 %v1618, %v1617
  %v1784 = vpack.c.b16 %v1620, %v1619
  %v1785 = vpack.c.b16 %v1622, %v1621
  %v1786 = vpack.c.b16 %v1624, %v1623
  %v1787 = vpack.c.b16 %v1626, %v1625
  %v1788 = vpack.c.b16 %v1628, %v1627
  %v1789 = vpack.c.b16 %v1630, %v1629
  %v1790 = vpack.c.b16 %v1632, %v1631
  %v1791 = vpack.c.b16 %v1634, %v1633
  %v1792 = vpack.c.b16 %v1636, %v1635
  %v1793 = vpack.c.b16 %v1638, %v1637
  %v1794 = vpack.c.b16 %v1640, %v1639
  %v1795 = vpack.c.b16 %v1642, %v1641
  %v1796 = vpack.c.b16 %v1644, %v1643
  %v1797 = vpack.c.b16 %v1646, %v1645
  %v1798 = vpack.c.b16 %v1648, %v1647
  %v1799 = vpack.c.b16 %v1650, %v1649
  %v1800 = vpack.c.b16 %v1652, %v1651
  %v1801 = vpack.c.b16 %v1654, %v1653
  %v1802 = vpack.c.b16 %v1656, %v1655
  %v1803 = vpack.c.b16 %v1658, %v1657
  %v1804 = vpack.c.b16 %v1660, %v1659
  %v1805 = vpack.c.b16 %v1662, %v1661
  %v1806 = vpack.c.b16 %v1664, %v1663
  %v1807 = vpack.c.b16 %v1666, %v1665
  %v1808 = vpack.c.b16 %v1668, %v1667
  %v1809 = vpack.c.b16 %v1670, %v1669
  %v1810 = vpack.c.b16 %v1672, %v1671
  %v1811 = vpack.c.b16 %v1674, %v1673
  %v1812 = vpack.c.b16 %v1676, %v1675
  %v1813 = vpack.c.b16 %v1678, %v1677
  %v1814 = vpack.c.b16 %v1680, %v1679
  %v1815 = vpack.c.b16 %v1682, %v1681
  %v1816 = vpack.c.b16 %v1684, %v1683
  %v1817 = vpack.c.b16 %v1686, %v1685
  %v1818 = vpack.c.b16 %v1688, %v1687
  %v1819 = vpack.c.b16 %v1690, %v1689
  %v1820 = vpack.c.b16 %v1692, %v1691
  %1949 = vmatpush.bf16.msra.mxu0 %v1700
  %1950 = vmatpush.bf16.msra.mxu0 %v1699
  %1951 = vmatpush.bf16.msra.mxu0 %v1698
  %1952 = vmatpush.bf16.msra.mxu0 %v1697
  %1953 = vmatpush.bf16.msra.mxu0 %v1696
  %1954 = vmatpush.bf16.msra.mxu0 %v1695
  %1955 = vmatpush.bf16.msra.mxu0 %v1694
  %1956 = vmatpush.bf16.msra.mxu0 %v1693
  %1957 = vmatmul.bf16.gmra.mxu0 %v741
  %v1958 = vpop.f32.mrf.mxu0
  %v1959 = vadd.f32 0.0, %v1958
  %v1960 = vpop.f32.mrf.mxu0
  %v1961 = vadd.f32 0.0, %v1960
  %1962 = vmatmul.bf16.gmra.mxu0 %v742
  %v1963 = vpop.f32.mrf.mxu0
  %v1964 = vadd.f32 0.0, %v1963
  %v1965 = vpop.f32.mrf.mxu0
  %v1966 = vadd.f32 0.0, %v1965
  %1967 = vdwg.mxu0
  %1968 = vmatpush.bf16.msra.mxu0 %v1708
  %1969 = vmatpush.bf16.msra.mxu0 %v1707
  %1970 = vmatpush.bf16.msra.mxu0 %v1706
  %1971 = vmatpush.bf16.msra.mxu0 %v1705
  %1972 = vmatpush.bf16.msra.mxu0 %v1704
  %1973 = vmatpush.bf16.msra.mxu0 %v1703
  %1974 = vmatpush.bf16.msra.mxu0 %v1702
  %1975 = vmatpush.bf16.msra.mxu0 %v1701
  %1976 = vmatmul.bf16.gmra.mxu0 %v753
  %v1977 = vpop.f32.mrf.mxu0
  %v1978 = vadd.f32 %v1959, %v1977
  %v1979 = vpop.f32.mrf.mxu0
  %v1980 = vadd.f32 %v1961, %v1979
  %1981 = vmatmul.bf16.gmra.mxu0 %v754
  %v1982 = vpop.f32.mrf.mxu0
  %v1983 = vadd.f32 %v1964, %v1982
  %v1984 = vpop.f32.mrf.mxu0
  %v1985 = vadd.f32 %v1966, %v1984
  %1986 = vdwg.mxu0
  %1987 = vmatpush.bf16.msra.mxu0 %v1716
  %1988 = vmatpush.bf16.msra.mxu0 %v1715
  %1989 = vmatpush.bf16.msra.mxu0 %v1714
  %1990 = vmatpush.bf16.msra.mxu0 %v1713
  %1991 = vmatpush.bf16.msra.mxu0 %v1712
  %1992 = vmatpush.bf16.msra.mxu0 %v1711
  %1993 = vmatpush.bf16.msra.mxu0 %v1710
  %1994 = vmatpush.bf16.msra.mxu0 %v1709
  %1995 = vmatmul.bf16.gmra.mxu0 %v765
  %v1996 = vpop.f32.mrf.mxu0
  %v1997 = vadd.f32 %v1978, %v1996
  %v1998 = vpop.f32.mrf.mxu0
  %v1999 = vadd.f32 %v1980, %v1998
  %2000 = vmatmul.bf16.gmra.mxu0 %v766
  %v2001 = vpop.f32.mrf.mxu0
  %v2002 = vadd.f32 %v1983, %v2001
  %v2003 = vpop.f32.mrf.mxu0
  %v2004 = vadd.f32 %v1985, %v2003
  %2005 = vdwg.mxu0
  %2006 = vmatpush.bf16.msra.mxu0 %v1724
  %2007 = vmatpush.bf16.msra.mxu0 %v1723
  %2008 = vmatpush.bf16.msra.mxu0 %v1722
  %2009 = vmatpush.bf16.msra.mxu0 %v1721
  %2010 = vmatpush.bf16.msra.mxu0 %v1720
  %2011 = vmatpush.bf16.msra.mxu0 %v1719
  %2012 = vmatpush.bf16.msra.mxu0 %v1718
  %2013 = vmatpush.bf16.msra.mxu0 %v1717
  %2014 = vmatmul.bf16.gmra.mxu0 %v777
  %v2015 = vpop.f32.mrf.mxu0
  %v2016 = vadd.f32 %v1997, %v2015
  %v2017 = vpop.f32.mrf.mxu0
  %v2018 = vadd.f32 %v1999, %v2017
  %2019 = vmatmul.bf16.gmra.mxu0 %v778
  %v2020 = vpop.f32.mrf.mxu0
  %v2021 = vadd.f32 %v2002, %v2020
  %v2022 = vpop.f32.mrf.mxu0
  %v2023 = vadd.f32 %v2004, %v2022
  %2024 = vdwg.mxu0
  %2025 = vmatpush.bf16.msra.mxu0 %v1732
  %2026 = vmatpush.bf16.msra.mxu0 %v1731
  %2027 = vmatpush.bf16.msra.mxu0 %v1730
  %2028 = vmatpush.bf16.msra.mxu0 %v1729
  %2029 = vmatpush.bf16.msra.mxu0 %v1728
  %2030 = vmatpush.bf16.msra.mxu0 %v1727
  %2031 = vmatpush.bf16.msra.mxu0 %v1726
  %2032 = vmatpush.bf16.msra.mxu0 %v1725
  %2033 = vmatmul.bf16.gmra.mxu0 %v789
  %v2034 = vpop.f32.mrf.mxu0
  %v2035 = vadd.f32 %v2016, %v2034
  %v2036 = vpop.f32.mrf.mxu0
  %v2037 = vadd.f32 %v2018, %v2036
  %2038 = vmatmul.bf16.gmra.mxu0 %v790
  %v2039 = vpop.f32.mrf.mxu0
  %v2040 = vadd.f32 %v2021, %v2039
  %v2041 = vpop.f32.mrf.mxu0
  %v2042 = vadd.f32 %v2023, %v2041
  %2043 = vdwg.mxu0
  %2044 = vmatpush.bf16.msra.mxu0 %v1740
  %2045 = vmatpush.bf16.msra.mxu0 %v1739
  %2046 = vmatpush.bf16.msra.mxu0 %v1738
  %2047 = vmatpush.bf16.msra.mxu0 %v1737
  %2048 = vmatpush.bf16.msra.mxu0 %v1736
  %2049 = vmatpush.bf16.msra.mxu0 %v1735
  %2050 = vmatpush.bf16.msra.mxu0 %v1734
  %2051 = vmatpush.bf16.msra.mxu0 %v1733
  %2052 = vmatmul.bf16.gmra.mxu0 %v801
  %v2053 = vpop.f32.mrf.mxu0
  %v2054 = vadd.f32 %v2035, %v2053
  %v2055 = vpop.f32.mrf.mxu0
  %v2056 = vadd.f32 %v2037, %v2055
  %2057 = vmatmul.bf16.gmra.mxu0 %v802
  %v2058 = vpop.f32.mrf.mxu0
  %v2059 = vadd.f32 %v2040, %v2058
  %v2060 = vpop.f32.mrf.mxu0
  %v2061 = vadd.f32 %v2042, %v2060
  %2062 = vdwg.mxu0
  %2063 = vmatpush.bf16.msra.mxu0 %v1748
  %2064 = vmatpush.bf16.msra.mxu0 %v1747
  %2065 = vmatpush.bf16.msra.mxu0 %v1746
  %2066 = vmatpush.bf16.msra.mxu0 %v1745
  %2067 = vmatpush.bf16.msra.mxu0 %v1744
  %2068 = vmatpush.bf16.msra.mxu0 %v1743
  %2069 = vmatpush.bf16.msra.mxu0 %v1742
  %2070 = vmatpush.bf16.msra.mxu0 %v1741
  %2071 = vmatmul.bf16.gmra.mxu0 %v813
  %v2072 = vpop.f32.mrf.mxu0
  %v2073 = vadd.f32 %v2054, %v2072
  %v2074 = vpop.f32.mrf.mxu0
  %v2075 = vadd.f32 %v2056, %v2074
  %2076 = vmatmul.bf16.gmra.mxu0 %v814
  %v2077 = vpop.f32.mrf.mxu0
  %v2078 = vadd.f32 %v2059, %v2077
  %v2079 = vpop.f32.mrf.mxu0
  %v2080 = vadd.f32 %v2061, %v2079
  %2081 = vdwg.mxu0
  %2082 = vmatpush.bf16.msra.mxu0 %v1756
  %2083 = vmatpush.bf16.msra.mxu0 %v1755
  %2084 = vmatpush.bf16.msra.mxu0 %v1754
  %2085 = vmatpush.bf16.msra.mxu0 %v1753
  %2086 = vmatpush.bf16.msra.mxu0 %v1752
  %2087 = vmatpush.bf16.msra.mxu0 %v1751
  %2088 = vmatpush.bf16.msra.mxu0 %v1750
  %2089 = vmatpush.bf16.msra.mxu0 %v1749
  %2090 = vmatmul.bf16.gmra.mxu0 %v825
  %v2091 = vpop.f32.mrf.mxu0
  %v2092 = vadd.f32 %v2073, %v2091
  %v2093 = vpop.f32.mrf.mxu0
  %v2094 = vadd.f32 %v2075, %v2093
  %2095 = vmatmul.bf16.gmra.mxu0 %v826
  %v2096 = vpop.f32.mrf.mxu0
  %v2097 = vadd.f32 %v2078, %v2096
  %v2098 = vpop.f32.mrf.mxu0
  %v2099 = vadd.f32 %v2080, %v2098
  %2100 = vdwg.mxu0
  %2101 = vmatpush.bf16.msra.mxu0 %v1764
  %2102 = vmatpush.bf16.msra.mxu0 %v1763
  %2103 = vmatpush.bf16.msra.mxu0 %v1762
  %2104 = vmatpush.bf16.msra.mxu0 %v1761
  %2105 = vmatpush.bf16.msra.mxu0 %v1760
  %2106 = vmatpush.bf16.msra.mxu0 %v1759
  %2107 = vmatpush.bf16.msra.mxu0 %v1758
  %2108 = vmatpush.bf16.msra.mxu0 %v1757
  %2109 = vmatmul.bf16.gmra.mxu0 %v837
  %v2110 = vpop.f32.mrf.mxu0
  %v2111 = vadd.f32 %v2092, %v2110
  %v2112 = vpop.f32.mrf.mxu0
  %v2113 = vadd.f32 %v2094, %v2112
  %2114 = vmatmul.bf16.gmra.mxu0 %v838
  %v2115 = vpop.f32.mrf.mxu0
  %v2116 = vadd.f32 %v2097, %v2115
  %v2117 = vpop.f32.mrf.mxu0
  %v2118 = vadd.f32 %v2099, %v2117
  %2119 = vdwg.mxu0
  %2120 = vmatpush.bf16.msra.mxu0 %v1772
  %2121 = vmatpush.bf16.msra.mxu0 %v1771
  %2122 = vmatpush.bf16.msra.mxu0 %v1770
  %2123 = vmatpush.bf16.msra.mxu0 %v1769
  %2124 = vmatpush.bf16.msra.mxu0 %v1768
  %2125 = vmatpush.bf16.msra.mxu0 %v1767
  %2126 = vmatpush.bf16.msra.mxu0 %v1766
  %2127 = vmatpush.bf16.msra.mxu0 %v1765
  %2128 = vmatmul.bf16.gmra.mxu0 %v849
  %v2129 = vpop.f32.mrf.mxu0
  %v2130 = vadd.f32 %v2111, %v2129
  %v2131 = vpop.f32.mrf.mxu0
  %v2132 = vadd.f32 %v2113, %v2131
  %2133 = vmatmul.bf16.gmra.mxu0 %v850
  %v2134 = vpop.f32.mrf.mxu0
  %v2135 = vadd.f32 %v2116, %v2134
  %v2136 = vpop.f32.mrf.mxu0
  %v2137 = vadd.f32 %v2118, %v2136
  %2138 = vdwg.mxu0
  %2139 = vmatpush.bf16.msra.mxu0 %v1780
  %2140 = vmatpush.bf16.msra.mxu0 %v1779
  %2141 = vmatpush.bf16.msra.mxu0 %v1778
  %2142 = vmatpush.bf16.msra.mxu0 %v1777
  %2143 = vmatpush.bf16.msra.mxu0 %v1776
  %2144 = vmatpush.bf16.msra.mxu0 %v1775
  %2145 = vmatpush.bf16.msra.mxu0 %v1774
  %2146 = vmatpush.bf16.msra.mxu0 %v1773
  %2147 = vmatmul.bf16.gmra.mxu0 %v861
  %v2148 = vpop.f32.mrf.mxu0
  %v2149 = vadd.f32 %v2130, %v2148
  %v2150 = vpop.f32.mrf.mxu0
  %v2151 = vadd.f32 %v2132, %v2150
  %2152 = vmatmul.bf16.gmra.mxu0 %v862
  %v2153 = vpop.f32.mrf.mxu0
  %v2154 = vadd.f32 %v2135, %v2153
  %v2155 = vpop.f32.mrf.mxu0
  %v2156 = vadd.f32 %v2137, %v2155
  %2157 = vdwg.mxu0
  %2158 = vmatpush.bf16.msra.mxu0 %v1788
  %2159 = vmatpush.bf16.msra.mxu0 %v1787
  %2160 = vmatpush.bf16.msra.mxu0 %v1786
  %2161 = vmatpush.bf16.msra.mxu0 %v1785
  %2162 = vmatpush.bf16.msra.mxu0 %v1784
  %2163 = vmatpush.bf16.msra.mxu0 %v1783
  %2164 = vmatpush.bf16.msra.mxu0 %v1782
  %2165 = vmatpush.bf16.msra.mxu0 %v1781
  %2166 = vmatmul.bf16.gmra.mxu0 %v873
  %v2167 = vpop.f32.mrf.mxu0
  %v2168 = vadd.f32 %v2149, %v2167
  %v2169 = vpop.f32.mrf.mxu0
  %v2170 = vadd.f32 %v2151, %v2169
  %2171 = vmatmul.bf16.gmra.mxu0 %v874
  %v2172 = vpop.f32.mrf.mxu0
  %v2173 = vadd.f32 %v2154, %v2172
  %v2174 = vpop.f32.mrf.mxu0
  %v2175 = vadd.f32 %v2156, %v2174
  %2176 = vdwg.mxu0
  %2177 = vmatpush.bf16.msra.mxu0 %v1796
  %2178 = vmatpush.bf16.msra.mxu0 %v1795
  %2179 = vmatpush.bf16.msra.mxu0 %v1794
  %2180 = vmatpush.bf16.msra.mxu0 %v1793
  %2181 = vmatpush.bf16.msra.mxu0 %v1792
  %2182 = vmatpush.bf16.msra.mxu0 %v1791
  %2183 = vmatpush.bf16.msra.mxu0 %v1790
  %2184 = vmatpush.bf16.msra.mxu0 %v1789
  %2185 = vmatmul.bf16.gmra.mxu0 %v885
  %v2186 = vpop.f32.mrf.mxu0
  %v2187 = vadd.f32 %v2168, %v2186
  %v2188 = vpop.f32.mrf.mxu0
  %v2189 = vadd.f32 %v2170, %v2188
  %2190 = vmatmul.bf16.gmra.mxu0 %v886
  %v2191 = vpop.f32.mrf.mxu0
  %v2192 = vadd.f32 %v2173, %v2191
  %v2193 = vpop.f32.mrf.mxu0
  %v2194 = vadd.f32 %v2175, %v2193
  %2195 = vdwg.mxu0
  %2196 = vmatpush.bf16.msra.mxu0 %v1804
  %2197 = vmatpush.bf16.msra.mxu0 %v1803
  %2198 = vmatpush.bf16.msra.mxu0 %v1802
  %2199 = vmatpush.bf16.msra.mxu0 %v1801
  %2200 = vmatpush.bf16.msra.mxu0 %v1800
  %2201 = vmatpush.bf16.msra.mxu0 %v1799
  %2202 = vmatpush.bf16.msra.mxu0 %v1798
  %2203 = vmatpush.bf16.msra.mxu0 %v1797
  %2204 = vmatmul.bf16.gmra.mxu0 %v897
  %v2205 = vpop.f32.mrf.mxu0
  %v2206 = vadd.f32 %v2187, %v2205
  %v2207 = vpop.f32.mrf.mxu0
  %v2208 = vadd.f32 %v2189, %v2207
  %2209 = vmatmul.bf16.gmra.mxu0 %v898
  %v2210 = vpop.f32.mrf.mxu0
  %v2211 = vadd.f32 %v2192, %v2210
  %v2212 = vpop.f32.mrf.mxu0
  %v2213 = vadd.f32 %v2194, %v2212
  %2214 = vdwg.mxu0
  %2215 = vmatpush.bf16.msra.mxu0 %v1812
  %2216 = vmatpush.bf16.msra.mxu0 %v1811
  %2217 = vmatpush.bf16.msra.mxu0 %v1810
  %2218 = vmatpush.bf16.msra.mxu0 %v1809
  %2219 = vmatpush.bf16.msra.mxu0 %v1808
  %2220 = vmatpush.bf16.msra.mxu0 %v1807
  %2221 = vmatpush.bf16.msra.mxu0 %v1806
  %2222 = vmatpush.bf16.msra.mxu0 %v1805
  %2223 = vmatmul.bf16.gmra.mxu0 %v909
  %v2224 = vpop.f32.mrf.mxu0
  %v2225 = vadd.f32 %v2206, %v2224
  %v2226 = vpop.f32.mrf.mxu0
  %v2227 = vadd.f32 %v2208, %v2226
  %2228 = vmatmul.bf16.gmra.mxu0 %v910
  %v2229 = vpop.f32.mrf.mxu0
  %v2230 = vadd.f32 %v2211, %v2229
  %v2231 = vpop.f32.mrf.mxu0
  %v2232 = vadd.f32 %v2213, %v2231
  %2233 = vdwg.mxu0
  %2234 = vmatpush.bf16.msra.mxu0 %v1820
  %2235 = vmatpush.bf16.msra.mxu0 %v1819
  %2236 = vmatpush.bf16.msra.mxu0 %v1818
  %2237 = vmatpush.bf16.msra.mxu0 %v1817
  %2238 = vmatpush.bf16.msra.mxu0 %v1816
  %2239 = vmatpush.bf16.msra.mxu0 %v1815
  %2240 = vmatpush.bf16.msra.mxu0 %v1814
  %2241 = vmatpush.bf16.msra.mxu0 %v1813
  %2242 = vmatmul.bf16.gmra.mxu0 %v921
  %v2243 = vpop.f32.mrf.mxu0
  %v2244 = vadd.f32 %v2225, %v2243
  %v2245 = vpop.f32.mrf.mxu0
  %v2246 = vadd.f32 %v2227, %v2245
  %2247 = vmatmul.bf16.gmra.mxu0 %v922
  %v2248 = vpop.f32.mrf.mxu0
  %v2249 = vadd.f32 %v2230, %v2248
  %v2250 = vpop.f32.mrf.mxu0
  %v2251 = vadd.f32 %v2232, %v2250
  %2252 = vdwg.mxu0
  %v2253 = vmax.f32 %v2244, %v2246
  %v2254 = vmax.f32 %v2249, %v2251
  %v2255 = vmax.f32 %v2253, %v2254
  %s2256 = scalar_lea.vmem %s6, 1
  %v2257 = vld [vmem:[%s2256] sm:$0x1]
  %v2259 = vperm.slane %v2257, 0
  %v2261 = vadd.f32 %v2255, %v2259
  %v2262 = vmax.f32 %v2261, 0.0
  %v2263 = vpack.c.bf16 %v2262, %v2262
  %v2264 = vld [vmem:[%s2] sm:$0xf]
  %v2265 = vld [vmem:[%s2 + $0x4] sm:$0xf]
  %v2266 = vld [vmem:[%s2 + $0x8] sm:$0xf]
  %v2267 = vld [vmem:[%s2 + $0xc] sm:$0xf]
  %v2268 = vld [vmem:[%s2 + $0x10] sm:$0xf]
  %v2269 = vld [vmem:[%s2 + $0x14] sm:$0xf]
  %v2270 = vld [vmem:[%s2 + $0x18] sm:$0xf]
  %v2271 = vld [vmem:[%s2 + $0x1c] sm:$0xf]
  %v2272 = vld [vmem:[%s2 + $0x20] sm:$0xf]
  %v2273 = vld [vmem:[%s2 + $0x24] sm:$0xf]
  %v2274 = vld [vmem:[%s2 + $0x28] sm:$0xf]
  %v2275 = vld [vmem:[%s2 + $0x2c] sm:$0xf]
  %v2276 = vld [vmem:[%s2 + $0x30] sm:$0xf]
  %v2277 = vld [vmem:[%s2 + $0x34] sm:$0xf]
  %v2278 = vld [vmem:[%s2 + $0x38] sm:$0xf]
  %v2279 = vld [vmem:[%s2 + $0x3c] sm:$0xf]
  %v2280 = vld [vmem:[%s2 + $0x40] sm:$0xf]
  %v2281 = vld [vmem:[%s2 + $0x44] sm:$0xf]
  %v2282 = vld [vmem:[%s2 + $0x48] sm:$0xf]
  %v2283 = vld [vmem:[%s2 + $0x4c] sm:$0xf]
  %v2284 = vld [vmem:[%s2 + $0x50] sm:$0xf]
  %v2285 = vld [vmem:[%s2 + $0x54] sm:$0xf]
  %v2286 = vld [vmem:[%s2 + $0x58] sm:$0xf]
  %v2287 = vld [vmem:[%s2 + $0x5c] sm:$0xf]
  %v2288 = vld [vmem:[%s2 + $0x60] sm:$0xf]
  %v2289 = vld [vmem:[%s2 + $0x64] sm:$0xf]
  %v2290 = vld [vmem:[%s2 + $0x68] sm:$0xf]
  %v2291 = vld [vmem:[%s2 + $0x6c] sm:$0xf]
  %v2292 = vld [vmem:[%s2 + $0x70] sm:$0xf]
  %v2293 = vld [vmem:[%s2 + $0x74] sm:$0xf]
  %v2294 = vld [vmem:[%s2 + $0x78] sm:$0xf]
  %v2295 = vld [vmem:[%s2 + $0x7c] sm:$0xf]
  %v2296 = vld [vmem:[%s2 + $0x80] sm:$0xf]
  %v2297 = vld [vmem:[%s2 + $0x84] sm:$0xf]
  %v2298 = vld [vmem:[%s2 + $0x88] sm:$0xf]
  %v2299 = vld [vmem:[%s2 + $0x8c] sm:$0xf]
  %vm2300 = vcmask 1043456
  %v2303 = vsel %vm2300, %v2263, 0
  %v2341 = vunpack.c.l.b16 %v2264
  %v2342 = vunpack.c.l.b16 %v2265
  %v2343 = vunpack.c.l.b16 %v2266
  %v2344 = vunpack.c.l.b16 %v2267
  %v2345 = vunpack.c.l.b16 %v2268
  %v2346 = vunpack.c.l.b16 %v2269
  %v2347 = vunpack.c.l.b16 %v2270
  %v2348 = vunpack.c.l.b16 %v2271
  %v2349 = vunpack.c.l.b16 %v2272
  %v2350 = vunpack.c.l.b16 %v2273
  %v2351 = vunpack.c.l.b16 %v2274
  %v2352 = vunpack.c.l.b16 %v2275
  %v2353 = vunpack.c.l.b16 %v2276
  %v2354 = vunpack.c.l.b16 %v2277
  %v2355 = vunpack.c.l.b16 %v2278
  %v2356 = vunpack.c.l.b16 %v2279
  %v2357 = vunpack.c.l.b16 %v2280
  %v2358 = vunpack.c.l.b16 %v2281
  %v2359 = vunpack.c.l.b16 %v2282
  %v2360 = vunpack.c.l.b16 %v2283
  %v2361 = vunpack.c.l.b16 %v2284
  %v2362 = vunpack.c.l.b16 %v2285
  %v2363 = vunpack.c.l.b16 %v2286
  %v2364 = vunpack.c.l.b16 %v2287
  %v2365 = vunpack.c.l.b16 %v2288
  %v2366 = vunpack.c.l.b16 %v2289
  %v2367 = vunpack.c.l.b16 %v2290
  %v2368 = vunpack.c.l.b16 %v2291
  %v2369 = vunpack.c.l.b16 %v2292
  %v2370 = vunpack.c.l.b16 %v2293
  %v2371 = vunpack.c.l.b16 %v2294
  %v2372 = vunpack.c.l.b16 %v2295
  %v2373 = vunpack.c.l.b16 %v2296
  %v2374 = vunpack.c.l.b16 %v2297
  %v2375 = vunpack.c.l.b16 %v2298
  %v2376 = vunpack.c.l.b16 %v2299
  %v2377 = vpack.c.b16 %v2342, %v2341
  %v2378 = vpack.c.b16 %v2344, %v2343
  %v2379 = vpack.c.b16 %v2346, %v2345
  %v2380 = vpack.c.b16 %v2348, %v2347
  %v2381 = vpack.c.b16 %v2350, %v2349
  %v2382 = vpack.c.b16 %v2352, %v2351
  %v2383 = vpack.c.b16 %v2354, %v2353
  %v2384 = vpack.c.b16 %v2356, %v2355
  %v2385 = vpack.c.b16 %v2358, %v2357
  %v2386 = vpack.c.b16 %v2360, %v2359
  %v2387 = vpack.c.b16 %v2362, %v2361
  %v2388 = vpack.c.b16 %v2364, %v2363
  %v2389 = vpack.c.b16 %v2366, %v2365
  %v2390 = vpack.c.b16 %v2368, %v2367
  %v2391 = vpack.c.b16 %v2370, %v2369
  %v2392 = vpack.c.b16 %v2372, %v2371
  %v2393 = vpack.c.b16 %v2374, %v2373
  %v2394 = vpack.c.b16 %v2376, %v2375
  %2413 = vmatpush.bf16.msra.mxu0 0
  %2414 = vmatpush.bf16.msra.mxu0 0
  %2415 = vmatpush.bf16.msra.mxu0 0
  %2416 = vmatpush.bf16.msra.mxu0 0
  %2417 = vmatpush.bf16.msra.mxu0 0
  %2418 = vmatpush.bf16.msra.mxu0 0
  %2419 = vmatpush.bf16.msra.mxu0 0
  %2420 = vmatpush.bf16.msra.mxu0 %v2303
  %2421 = vmatmul.bf16.gmra.mxu0 %v2377
  %v2422 = vpop.f32.mrf.mxu0
  %v2423 = vadd.f32 0.0, %v2422
  %v2424 = vpop.f32.mrf.mxu0
  %v2425 = vadd.f32 0.0, %v2424
  %2426 = vmatmul.bf16.gmra.mxu0 %v2378
  %v2427 = vpop.f32.mrf.mxu0
  %v2428 = vadd.f32 0.0, %v2427
  %v2429 = vpop.f32.mrf.mxu0
  %v2430 = vadd.f32 0.0, %v2429
  %2431 = vmatmul.bf16.gmra.mxu0 %v2379
  %v2432 = vpop.f32.mrf.mxu0
  %v2433 = vadd.f32 0.0, %v2432
  %v2434 = vpop.f32.mrf.mxu0
  %v2435 = vadd.f32 0.0, %v2434
  %2436 = vmatmul.bf16.gmra.mxu0 %v2380
  %v2437 = vpop.f32.mrf.mxu0
  %v2438 = vadd.f32 0.0, %v2437
  %v2439 = vpop.f32.mrf.mxu0
  %v2440 = vadd.f32 0.0, %v2439
  %2441 = vmatmul.bf16.gmra.mxu0 %v2381
  %v2442 = vpop.f32.mrf.mxu0
  %v2443 = vadd.f32 0.0, %v2442
  %v2444 = vpop.f32.mrf.mxu0
  %v2445 = vadd.f32 0.0, %v2444
  %2446 = vmatmul.bf16.gmra.mxu0 %v2382
  %v2447 = vpop.f32.mrf.mxu0
  %v2448 = vadd.f32 0.0, %v2447
  %v2449 = vpop.f32.mrf.mxu0
  %v2450 = vadd.f32 0.0, %v2449
  %2451 = vmatmul.bf16.gmra.mxu0 %v2383
  %v2452 = vpop.f32.mrf.mxu0
  %v2453 = vadd.f32 0.0, %v2452
  %v2454 = vpop.f32.mrf.mxu0
  %v2455 = vadd.f32 0.0, %v2454
  %2456 = vmatmul.bf16.gmra.mxu0 %v2384
  %v2457 = vpop.f32.mrf.mxu0
  %v2458 = vadd.f32 0.0, %v2457
  %v2459 = vpop.f32.mrf.mxu0
  %v2460 = vadd.f32 0.0, %v2459
  %2461 = vmatmul.bf16.gmra.mxu0 %v2385
  %v2462 = vpop.f32.mrf.mxu0
  %v2463 = vadd.f32 0.0, %v2462
  %v2464 = vpop.f32.mrf.mxu0
  %v2465 = vadd.f32 0.0, %v2464
  %2466 = vmatmul.bf16.gmra.mxu0 %v2386
  %v2467 = vpop.f32.mrf.mxu0
  %v2468 = vadd.f32 0.0, %v2467
  %v2469 = vpop.f32.mrf.mxu0
  %v2470 = vadd.f32 0.0, %v2469
  %2471 = vmatmul.bf16.gmra.mxu0 %v2387
  %v2472 = vpop.f32.mrf.mxu0
  %v2473 = vadd.f32 0.0, %v2472
  %v2474 = vpop.f32.mrf.mxu0
  %v2475 = vadd.f32 0.0, %v2474
  %2476 = vmatmul.bf16.gmra.mxu0 %v2388
  %v2477 = vpop.f32.mrf.mxu0
  %v2478 = vadd.f32 0.0, %v2477
  %v2479 = vpop.f32.mrf.mxu0
  %v2480 = vadd.f32 0.0, %v2479
  %2481 = vmatmul.bf16.gmra.mxu0 %v2389
  %v2482 = vpop.f32.mrf.mxu0
  %v2483 = vadd.f32 0.0, %v2482
  %v2484 = vpop.f32.mrf.mxu0
  %v2485 = vadd.f32 0.0, %v2484
  %2486 = vmatmul.bf16.gmra.mxu0 %v2390
  %v2487 = vpop.f32.mrf.mxu0
  %v2488 = vadd.f32 0.0, %v2487
  %v2489 = vpop.f32.mrf.mxu0
  %v2490 = vadd.f32 0.0, %v2489
  %2491 = vmatmul.bf16.gmra.mxu0 %v2391
  %v2492 = vpop.f32.mrf.mxu0
  %v2493 = vadd.f32 0.0, %v2492
  %v2494 = vpop.f32.mrf.mxu0
  %v2495 = vadd.f32 0.0, %v2494
  %2496 = vmatmul.bf16.gmra.mxu0 %v2392
  %v2497 = vpop.f32.mrf.mxu0
  %v2498 = vadd.f32 0.0, %v2497
  %v2499 = vpop.f32.mrf.mxu0
  %v2500 = vadd.f32 0.0, %v2499
  %2501 = vmatmul.bf16.gmra.mxu0 %v2393
  %v2502 = vpop.f32.mrf.mxu0
  %v2503 = vadd.f32 0.0, %v2502
  %v2504 = vpop.f32.mrf.mxu0
  %v2505 = vadd.f32 0.0, %v2504
  %2506 = vmatmul.bf16.gmra.mxu0 %v2394
  %v2507 = vpop.f32.mrf.mxu0
  %v2508 = vadd.f32 0.0, %v2507
  %v2509 = vpop.f32.mrf.mxu0
  %v2510 = vadd.f32 0.0, %v2509
  %2511 = vdwg.mxu0
  %v2512 = vpack.c.bf16 %v2423, %v2423
  %v2513 = vpack.c.bf16 %v2425, %v2425
  %v2514 = vpack.c.bf16 %v2428, %v2428
  %v2515 = vpack.c.bf16 %v2430, %v2430
  %v2516 = vpack.c.bf16 %v2433, %v2433
  %v2517 = vpack.c.bf16 %v2435, %v2435
  %v2518 = vpack.c.bf16 %v2438, %v2438
  %v2519 = vpack.c.bf16 %v2440, %v2440
  %v2520 = vpack.c.bf16 %v2443, %v2443
  %v2521 = vpack.c.bf16 %v2445, %v2445
  %v2522 = vpack.c.bf16 %v2448, %v2448
  %v2523 = vpack.c.bf16 %v2450, %v2450
  %v2524 = vpack.c.bf16 %v2453, %v2453
  %v2525 = vpack.c.bf16 %v2455, %v2455
  %v2526 = vpack.c.bf16 %v2458, %v2458
  %v2527 = vpack.c.bf16 %v2460, %v2460
  %v2528 = vpack.c.bf16 %v2463, %v2463
  %v2529 = vpack.c.bf16 %v2465, %v2465
  %v2530 = vpack.c.bf16 %v2468, %v2468
  %v2531 = vpack.c.bf16 %v2470, %v2470
  %v2532 = vpack.c.bf16 %v2473, %v2473
  %v2533 = vpack.c.bf16 %v2475, %v2475
  %v2534 = vpack.c.bf16 %v2478, %v2478
  %v2535 = vpack.c.bf16 %v2480, %v2480
  %v2536 = vpack.c.bf16 %v2483, %v2483
  %v2537 = vpack.c.bf16 %v2485, %v2485
  %v2538 = vpack.c.bf16 %v2488, %v2488
  %v2539 = vpack.c.bf16 %v2490, %v2490
  %v2540 = vpack.c.bf16 %v2493, %v2493
  %v2541 = vpack.c.bf16 %v2495, %v2495
  %v2542 = vpack.c.bf16 %v2498, %v2498
  %v2543 = vpack.c.bf16 %v2500, %v2500
  %v2544 = vpack.c.bf16 %v2503, %v2503
  %v2545 = vpack.c.bf16 %v2505, %v2505
  %v2546 = vpack.c.bf16 %v2508, %v2508
  %v2547 = vpack.c.bf16 %v2510, %v2510
  %v2552 = vunpack.c.l.b16 %v2512
  %v2553 = vunpack.c.l.b16 %v2513
  %v2554 = vunpack.c.l.b16 %v2514
  %v2555 = vunpack.c.l.b16 %v2515
  %v2556 = vpack.c.b16 %v2553, %v2552
  %v2557 = vpack.c.b16 %v2555, %v2554
  %v2564 = vunpack.c.l.b16 %v2516
  %v2565 = vunpack.c.l.b16 %v2517
  %v2566 = vunpack.c.l.b16 %v2518
  %v2567 = vunpack.c.l.b16 %v2519
  %v2568 = vpack.c.b16 %v2565, %v2564
  %v2569 = vpack.c.b16 %v2567, %v2566
  %v2576 = vunpack.c.l.b16 %v2520
  %v2577 = vunpack.c.l.b16 %v2521
  %v2578 = vunpack.c.l.b16 %v2522
  %v2579 = vunpack.c.l.b16 %v2523
  %v2580 = vpack.c.b16 %v2577, %v2576
  %v2581 = vpack.c.b16 %v2579, %v2578
  %v2588 = vunpack.c.l.b16 %v2524
  %v2589 = vunpack.c.l.b16 %v2525
  %v2590 = vunpack.c.l.b16 %v2526
  %v2591 = vunpack.c.l.b16 %v2527
  %v2592 = vpack.c.b16 %v2589, %v2588
  %v2593 = vpack.c.b16 %v2591, %v2590
  %v2600 = vunpack.c.l.b16 %v2528
  %v2601 = vunpack.c.l.b16 %v2529
  %v2602 = vunpack.c.l.b16 %v2530
  %v2603 = vunpack.c.l.b16 %v2531
  %v2604 = vpack.c.b16 %v2601, %v2600
  %v2605 = vpack.c.b16 %v2603, %v2602
  %v2612 = vunpack.c.l.b16 %v2532
  %v2613 = vunpack.c.l.b16 %v2533
  %v2614 = vunpack.c.l.b16 %v2534
  %v2615 = vunpack.c.l.b16 %v2535
  %v2616 = vpack.c.b16 %v2613, %v2612
  %v2617 = vpack.c.b16 %v2615, %v2614
  %v2624 = vunpack.c.l.b16 %v2536
  %v2625 = vunpack.c.l.b16 %v2537
  %v2626 = vunpack.c.l.b16 %v2538
  %v2627 = vunpack.c.l.b16 %v2539
  %v2628 = vpack.c.b16 %v2625, %v2624
  %v2629 = vpack.c.b16 %v2627, %v2626
  %v2636 = vunpack.c.l.b16 %v2540
  %v2637 = vunpack.c.l.b16 %v2541
  %v2638 = vunpack.c.l.b16 %v2542
  %v2639 = vunpack.c.l.b16 %v2543
  %v2640 = vpack.c.b16 %v2637, %v2636
  %v2641 = vpack.c.b16 %v2639, %v2638
  %v2648 = vunpack.c.l.b16 %v2544
  %v2649 = vunpack.c.l.b16 %v2545
  %v2650 = vunpack.c.l.b16 %v2546
  %v2651 = vunpack.c.l.b16 %v2547
  %v2652 = vpack.c.b16 %v2649, %v2648
  %v2653 = vpack.c.b16 %v2651, %v2650
  %v2656 = vld [vmem:[%s5] sm:$0xf]
  %v2657 = vld [vmem:[%s5 + $0x4] sm:$0xf]
  %v2658 = vld [vmem:[%s5 + $0x8] sm:$0xf]
  %v2659 = vld [vmem:[%s5 + $0xc] sm:$0xf]
  %v2660 = vld [vmem:[%s5 + $0x10] sm:$0xf]
  %v2661 = vld [vmem:[%s5 + $0x14] sm:$0xf]
  %v2662 = vld [vmem:[%s5 + $0x18] sm:$0xf]
  %v2663 = vld [vmem:[%s5 + $0x1c] sm:$0xf]
  %v2664 = vld [vmem:[%s5 + $0x20] sm:$0xf]
  %v2665 = vld [vmem:[%s5 + $0x24] sm:$0xf]
  %v2666 = vld [vmem:[%s5 + $0x28] sm:$0xf]
  %v2667 = vld [vmem:[%s5 + $0x2c] sm:$0xf]
  %v2668 = vld [vmem:[%s5 + $0x30] sm:$0xf]
  %v2669 = vld [vmem:[%s5 + $0x34] sm:$0xf]
  %v2670 = vld [vmem:[%s5 + $0x38] sm:$0xf]
  %v2671 = vld [vmem:[%s5 + $0x3c] sm:$0xf]
  %v2672 = vld [vmem:[%s5 + $0x40] sm:$0xf]
  %v2673 = vld [vmem:[%s5 + $0x44] sm:$0xf]
  %v2674 = vld [vmem:[%s5 + $0x48] sm:$0xf]
  %v2675 = vld [vmem:[%s5 + $0x4c] sm:$0xf]
  %v2676 = vld [vmem:[%s5 + $0x50] sm:$0xf]
  %v2677 = vld [vmem:[%s5 + $0x54] sm:$0xf]
  %v2678 = vld [vmem:[%s5 + $0x58] sm:$0xf]
  %v2679 = vld [vmem:[%s5 + $0x5c] sm:$0xf]
  %v2680 = vld [vmem:[%s5 + $0x60] sm:$0xf]
  %v2681 = vld [vmem:[%s5 + $0x64] sm:$0xf]
  %v2682 = vld [vmem:[%s5 + $0x68] sm:$0xf]
  %v2683 = vld [vmem:[%s5 + $0x6c] sm:$0xf]
  %v2684 = vld [vmem:[%s5 + $0x70] sm:$0xf]
  %v2685 = vld [vmem:[%s5 + $0x74] sm:$0xf]
  %v2686 = vld [vmem:[%s5 + $0x78] sm:$0xf]
  %v2687 = vld [vmem:[%s5 + $0x7c] sm:$0xf]
  %v2688 = vld [vmem:[%s5 + $0x80] sm:$0xf]
  %v2689 = vld [vmem:[%s5 + $0x84] sm:$0xf]
  %v2690 = vld [vmem:[%s5 + $0x88] sm:$0xf]
  %v2691 = vld [vmem:[%s5 + $0x8c] sm:$0xf]
  %v2692 = vld [vmem:[%s5 + $0x90] sm:$0xf]
  %v2693 = vld [vmem:[%s5 + $0x94] sm:$0xf]
  %v2694 = vld [vmem:[%s5 + $0x98] sm:$0xf]
  %v2695 = vld [vmem:[%s5 + $0x9c] sm:$0xf]
  %v2696 = vld [vmem:[%s5 + $0xa0] sm:$0xf]
  %v2697 = vld [vmem:[%s5 + $0xa4] sm:$0xf]
  %v2698 = vld [vmem:[%s5 + $0xa8] sm:$0xf]
  %v2699 = vld [vmem:[%s5 + $0xac] sm:$0xf]
  %v2700 = vld [vmem:[%s5 + $0xb0] sm:$0xf]
  %v2701 = vld [vmem:[%s5 + $0xb4] sm:$0xf]
  %v2702 = vld [vmem:[%s5 + $0xb8] sm:$0xf]
  %v2703 = vld [vmem:[%s5 + $0xbc] sm:$0xf]
  %v2704 = vld [vmem:[%s5 + $0xc0] sm:$0xf]
  %v2705 = vld [vmem:[%s5 + $0xc4] sm:$0xf]
  %v2706 = vld [vmem:[%s5 + $0xc8] sm:$0xf]
  %v2707 = vld [vmem:[%s5 + $0xcc] sm:$0xf]
  %v2708 = vld [vmem:[%s5 + $0xd0] sm:$0xf]
  %v2709 = vld [vmem:[%s5 + $0xd4] sm:$0xf]
  %v2710 = vld [vmem:[%s5 + $0xd8] sm:$0xf]
  %v2711 = vld [vmem:[%s5 + $0xdc] sm:$0xf]
  %v2712 = vld [vmem:[%s5 + $0xe0] sm:$0xf]
  %v2713 = vld [vmem:[%s5 + $0xe4] sm:$0xf]
  %v2714 = vld [vmem:[%s5 + $0xe8] sm:$0xf]
  %v2715 = vld [vmem:[%s5 + $0xec] sm:$0xf]
  %v2716 = vld [vmem:[%s5 + $0xf0] sm:$0xf]
  %v2717 = vld [vmem:[%s5 + $0xf4] sm:$0xf]
  %v2718 = vld [vmem:[%s5 + $0xf8] sm:$0xf]
  %v2719 = vld [vmem:[%s5 + $0xfc] sm:$0xf]
  %v2720 = vld [vmem:[%s5 + $0x100] sm:$0xf]
  %v2721 = vld [vmem:[%s5 + $0x104] sm:$0xf]
  %v2722 = vld [vmem:[%s5 + $0x108] sm:$0xf]
  %v2723 = vld [vmem:[%s5 + $0x10c] sm:$0xf]
  %v2724 = vld [vmem:[%s5 + $0x110] sm:$0xf]
  %v2725 = vld [vmem:[%s5 + $0x114] sm:$0xf]
  %v2726 = vld [vmem:[%s5 + $0x118] sm:$0xf]
  %v2727 = vld [vmem:[%s5 + $0x11c] sm:$0xf]
  %v2728 = vld [vmem:[%s5 + $0x120] sm:$0xf]
  %v2729 = vld [vmem:[%s5 + $0x124] sm:$0xf]
  %v2730 = vld [vmem:[%s5 + $0x128] sm:$0xf]
  %v2731 = vld [vmem:[%s5 + $0x12c] sm:$0xf]
  %v2732 = vld [vmem:[%s5 + $0x130] sm:$0xf]
  %v2733 = vld [vmem:[%s5 + $0x134] sm:$0xf]
  %v2734 = vld [vmem:[%s5 + $0x138] sm:$0xf]
  %v2735 = vld [vmem:[%s5 + $0x13c] sm:$0xf]
  %v2736 = vld [vmem:[%s5 + $0x140] sm:$0xf]
  %v2737 = vld [vmem:[%s5 + $0x144] sm:$0xf]
  %v2738 = vld [vmem:[%s5 + $0x148] sm:$0xf]
  %v2739 = vld [vmem:[%s5 + $0x14c] sm:$0xf]
  %v2740 = vld [vmem:[%s5 + $0x150] sm:$0xf]
  %v2741 = vld [vmem:[%s5 + $0x154] sm:$0xf]
  %v2742 = vld [vmem:[%s5 + $0x158] sm:$0xf]
  %v2743 = vld [vmem:[%s5 + $0x15c] sm:$0xf]
  %v2744 = vld [vmem:[%s5 + $0x160] sm:$0xf]
  %v2745 = vld [vmem:[%s5 + $0x164] sm:$0xf]
  %v2746 = vld [vmem:[%s5 + $0x168] sm:$0xf]
  %v2747 = vld [vmem:[%s5 + $0x16c] sm:$0xf]
  %v2748 = vld [vmem:[%s5 + $0x170] sm:$0xf]
  %v2749 = vld [vmem:[%s5 + $0x174] sm:$0xf]
  %v2750 = vld [vmem:[%s5 + $0x178] sm:$0xf]
  %v2751 = vld [vmem:[%s5 + $0x17c] sm:$0xf]
  %v2752 = vld [vmem:[%s5 + $0x180] sm:$0xf]
  %v2753 = vld [vmem:[%s5 + $0x184] sm:$0xf]
  %v2754 = vld [vmem:[%s5 + $0x188] sm:$0xf]
  %v2755 = vld [vmem:[%s5 + $0x18c] sm:$0xf]
  %v2756 = vld [vmem:[%s5 + $0x190] sm:$0xf]
  %v2757 = vld [vmem:[%s5 + $0x194] sm:$0xf]
  %v2758 = vld [vmem:[%s5 + $0x198] sm:$0xf]
  %v2759 = vld [vmem:[%s5 + $0x19c] sm:$0xf]
  %v2760 = vld [vmem:[%s5 + $0x1a0] sm:$0xf]
  %v2761 = vld [vmem:[%s5 + $0x1a4] sm:$0xf]
  %v2762 = vld [vmem:[%s5 + $0x1a8] sm:$0xf]
  %v2763 = vld [vmem:[%s5 + $0x1ac] sm:$0xf]
  %v2764 = vld [vmem:[%s5 + $0x1b0] sm:$0xf]
  %v2765 = vld [vmem:[%s5 + $0x1b4] sm:$0xf]
  %v2766 = vld [vmem:[%s5 + $0x1b8] sm:$0xf]
  %v2767 = vld [vmem:[%s5 + $0x1bc] sm:$0xf]
  %v2768 = vld [vmem:[%s5 + $0x1c0] sm:$0xf]
  %v2769 = vld [vmem:[%s5 + $0x1c4] sm:$0xf]
  %v2770 = vld [vmem:[%s5 + $0x1c8] sm:$0xf]
  %v2771 = vld [vmem:[%s5 + $0x1cc] sm:$0xf]
  %v2772 = vld [vmem:[%s5 + $0x1d0] sm:$0xf]
  %v2773 = vld [vmem:[%s5 + $0x1d4] sm:$0xf]
  %v2774 = vld [vmem:[%s5 + $0x1d8] sm:$0xf]
  %v2775 = vld [vmem:[%s5 + $0x1dc] sm:$0xf]
  %v2776 = vld [vmem:[%s5 + $0x1e0] sm:$0xf]
  %v2777 = vld [vmem:[%s5 + $0x1e4] sm:$0xf]
  %v2778 = vld [vmem:[%s5 + $0x1e8] sm:$0xf]
  %v2779 = vld [vmem:[%s5 + $0x1ec] sm:$0xf]
  %v2780 = vld [vmem:[%s5 + $0x1f0] sm:$0xf]
  %v2781 = vld [vmem:[%s5 + $0x1f4] sm:$0xf]
  %v2782 = vld [vmem:[%s5 + $0x1f8] sm:$0xf]
  %v2783 = vld [vmem:[%s5 + $0x1fc] sm:$0xf]
  %v2784 = vld [vmem:[%s5 + $0x200] sm:$0xf]
  %v2785 = vld [vmem:[%s5 + $0x204] sm:$0xf]
  %v2786 = vld [vmem:[%s5 + $0x208] sm:$0xf]
  %v2787 = vld [vmem:[%s5 + $0x20c] sm:$0xf]
  %v2788 = vld [vmem:[%s5 + $0x210] sm:$0xf]
  %v2789 = vld [vmem:[%s5 + $0x214] sm:$0xf]
  %v2790 = vld [vmem:[%s5 + $0x218] sm:$0xf]
  %v2791 = vld [vmem:[%s5 + $0x21c] sm:$0xf]
  %v2792 = vld [vmem:[%s5 + $0x220] sm:$0xf]
  %v2793 = vld [vmem:[%s5 + $0x224] sm:$0xf]
  %v2794 = vld [vmem:[%s5 + $0x228] sm:$0xf]
  %v2795 = vld [vmem:[%s5 + $0x22c] sm:$0xf]
  %v2796 = vld [vmem:[%s5 + $0x230] sm:$0xf]
  %v2797 = vld [vmem:[%s5 + $0x234] sm:$0xf]
  %v2798 = vld [vmem:[%s5 + $0x238] sm:$0xf]
  %v2799 = vld [vmem:[%s5 + $0x23c] sm:$0xf]
  %v2944 = vunpack.c.l.b16 %v2656
  %v2945 = vunpack.c.l.b16 %v2657
  %v2946 = vunpack.c.l.b16 %v2658
  %v2947 = vunpack.c.l.b16 %v2659
  %v2948 = vunpack.c.l.b16 %v2660
  %v2949 = vunpack.c.l.b16 %v2661
  %v2950 = vunpack.c.l.b16 %v2662
  %v2951 = vunpack.c.l.b16 %v2663
  %v2952 = vunpack.c.l.b16 %v2664
  %v2953 = vunpack.c.l.b16 %v2665
  %v2954 = vunpack.c.l.b16 %v2666
  %v2955 = vunpack.c.l.b16 %v2667
  %v2956 = vunpack.c.l.b16 %v2668
  %v2957 = vunpack.c.l.b16 %v2669
  %v2958 = vunpack.c.l.b16 %v2670
  %v2959 = vunpack.c.l.b16 %v2671
  %v2960 = vunpack.c.l.b16 %v2672
  %v2961 = vunpack.c.l.b16 %v2673
  %v2962 = vunpack.c.l.b16 %v2674
  %v2963 = vunpack.c.l.b16 %v2675
  %v2964 = vunpack.c.l.b16 %v2676
  %v2965 = vunpack.c.l.b16 %v2677
  %v2966 = vunpack.c.l.b16 %v2678
  %v2967 = vunpack.c.l.b16 %v2679
  %v2968 = vunpack.c.l.b16 %v2680
  %v2969 = vunpack.c.l.b16 %v2681
  %v2970 = vunpack.c.l.b16 %v2682
  %v2971 = vunpack.c.l.b16 %v2683
  %v2972 = vunpack.c.l.b16 %v2684
  %v2973 = vunpack.c.l.b16 %v2685
  %v2974 = vunpack.c.l.b16 %v2686
  %v2975 = vunpack.c.l.b16 %v2687
  %v2976 = vunpack.c.l.b16 %v2688
  %v2977 = vunpack.c.l.b16 %v2689
  %v2978 = vunpack.c.l.b16 %v2690
  %v2979 = vunpack.c.l.b16 %v2691
  %v2980 = vunpack.c.l.b16 %v2692
  %v2981 = vunpack.c.l.b16 %v2693
  %v2982 = vunpack.c.l.b16 %v2694
  %v2983 = vunpack.c.l.b16 %v2695
  %v2984 = vunpack.c.l.b16 %v2696
  %v2985 = vunpack.c.l.b16 %v2697
  %v2986 = vunpack.c.l.b16 %v2698
  %v2987 = vunpack.c.l.b16 %v2699
  %v2988 = vunpack.c.l.b16 %v2700
  %v2989 = vunpack.c.l.b16 %v2701
  %v2990 = vunpack.c.l.b16 %v2702
  %v2991 = vunpack.c.l.b16 %v2703
  %v2992 = vunpack.c.l.b16 %v2704
  %v2993 = vunpack.c.l.b16 %v2705
  %v2994 = vunpack.c.l.b16 %v2706
  %v2995 = vunpack.c.l.b16 %v2707
  %v2996 = vunpack.c.l.b16 %v2708
  %v2997 = vunpack.c.l.b16 %v2709
  %v2998 = vunpack.c.l.b16 %v2710
  %v2999 = vunpack.c.l.b16 %v2711
  %v3000 = vunpack.c.l.b16 %v2712
  %v3001 = vunpack.c.l.b16 %v2713
  %v3002 = vunpack.c.l.b16 %v2714
  %v3003 = vunpack.c.l.b16 %v2715
  %v3004 = vunpack.c.l.b16 %v2716
  %v3005 = vunpack.c.l.b16 %v2717
  %v3006 = vunpack.c.l.b16 %v2718
  %v3007 = vunpack.c.l.b16 %v2719
  %v3008 = vunpack.c.l.b16 %v2720
  %v3009 = vunpack.c.l.b16 %v2721
  %v3010 = vunpack.c.l.b16 %v2722
  %v3011 = vunpack.c.l.b16 %v2723
  %v3012 = vunpack.c.l.b16 %v2724
  %v3013 = vunpack.c.l.b16 %v2725
  %v3014 = vunpack.c.l.b16 %v2726
  %v3015 = vunpack.c.l.b16 %v2727
  %v3016 = vunpack.c.l.b16 %v2728
  %v3017 = vunpack.c.l.b16 %v2729
  %v3018 = vunpack.c.l.b16 %v2730
  %v3019 = vunpack.c.l.b16 %v2731
  %v3020 = vunpack.c.l.b16 %v2732
  %v3021 = vunpack.c.l.b16 %v2733
  %v3022 = vunpack.c.l.b16 %v2734
  %v3023 = vunpack.c.l.b16 %v2735
  %v3024 = vunpack.c.l.b16 %v2736
  %v3025 = vunpack.c.l.b16 %v2737
  %v3026 = vunpack.c.l.b16 %v2738
  %v3027 = vunpack.c.l.b16 %v2739
  %v3028 = vunpack.c.l.b16 %v2740
  %v3029 = vunpack.c.l.b16 %v2741
  %v3030 = vunpack.c.l.b16 %v2742
  %v3031 = vunpack.c.l.b16 %v2743
  %v3032 = vunpack.c.l.b16 %v2744
  %v3033 = vunpack.c.l.b16 %v2745
  %v3034 = vunpack.c.l.b16 %v2746
  %v3035 = vunpack.c.l.b16 %v2747
  %v3036 = vunpack.c.l.b16 %v2748
  %v3037 = vunpack.c.l.b16 %v2749
  %v3038 = vunpack.c.l.b16 %v2750
  %v3039 = vunpack.c.l.b16 %v2751
  %v3040 = vunpack.c.l.b16 %v2752
  %v3041 = vunpack.c.l.b16 %v2753
  %v3042 = vunpack.c.l.b16 %v2754
  %v3043 = vunpack.c.l.b16 %v2755
  %v3044 = vunpack.c.l.b16 %v2756
  %v3045 = vunpack.c.l.b16 %v2757
  %v3046 = vunpack.c.l.b16 %v2758
  %v3047 = vunpack.c.l.b16 %v2759
  %v3048 = vunpack.c.l.b16 %v2760
  %v3049 = vunpack.c.l.b16 %v2761
  %v3050 = vunpack.c.l.b16 %v2762
  %v3051 = vunpack.c.l.b16 %v2763
  %v3052 = vunpack.c.l.b16 %v2764
  %v3053 = vunpack.c.l.b16 %v2765
  %v3054 = vunpack.c.l.b16 %v2766
  %v3055 = vunpack.c.l.b16 %v2767
  %v3056 = vunpack.c.l.b16 %v2768
  %v3057 = vunpack.c.l.b16 %v2769
  %v3058 = vunpack.c.l.b16 %v2770
  %v3059 = vunpack.c.l.b16 %v2771
  %v3060 = vunpack.c.l.b16 %v2772
  %v3061 = vunpack.c.l.b16 %v2773
  %v3062 = vunpack.c.l.b16 %v2774
  %v3063 = vunpack.c.l.b16 %v2775
  %v3064 = vunpack.c.l.b16 %v2776
  %v3065 = vunpack.c.l.b16 %v2777
  %v3066 = vunpack.c.l.b16 %v2778
  %v3067 = vunpack.c.l.b16 %v2779
  %v3068 = vunpack.c.l.b16 %v2780
  %v3069 = vunpack.c.l.b16 %v2781
  %v3070 = vunpack.c.l.b16 %v2782
  %v3071 = vunpack.c.l.b16 %v2783
  %v3072 = vunpack.c.l.b16 %v2784
  %v3073 = vunpack.c.l.b16 %v2785
  %v3074 = vunpack.c.l.b16 %v2786
  %v3075 = vunpack.c.l.b16 %v2787
  %v3076 = vunpack.c.l.b16 %v2788
  %v3077 = vunpack.c.l.b16 %v2789
  %v3078 = vunpack.c.l.b16 %v2790
  %v3079 = vunpack.c.l.b16 %v2791
  %v3080 = vunpack.c.l.b16 %v2792
  %v3081 = vunpack.c.l.b16 %v2793
  %v3082 = vunpack.c.l.b16 %v2794
  %v3083 = vunpack.c.l.b16 %v2795
  %v3084 = vunpack.c.l.b16 %v2796
  %v3085 = vunpack.c.l.b16 %v2797
  %v3086 = vunpack.c.l.b16 %v2798
  %v3087 = vunpack.c.l.b16 %v2799
  %v3088 = vpack.c.b16 %v2945, %v2944
  %v3089 = vpack.c.b16 %v2947, %v2946
  %v3090 = vpack.c.b16 %v2949, %v2948
  %v3091 = vpack.c.b16 %v2951, %v2950
  %v3092 = vpack.c.b16 %v2953, %v2952
  %v3093 = vpack.c.b16 %v2955, %v2954
  %v3094 = vpack.c.b16 %v2957, %v2956
  %v3095 = vpack.c.b16 %v2959, %v2958
  %v3096 = vpack.c.b16 %v2961, %v2960
  %v3097 = vpack.c.b16 %v2963, %v2962
  %v3098 = vpack.c.b16 %v2965, %v2964
  %v3099 = vpack.c.b16 %v2967, %v2966
  %v3100 = vpack.c.b16 %v2969, %v2968
  %v3101 = vpack.c.b16 %v2971, %v2970
  %v3102 = vpack.c.b16 %v2973, %v2972
  %v3103 = vpack.c.b16 %v2975, %v2974
  %v3104 = vpack.c.b16 %v2977, %v2976
  %v3105 = vpack.c.b16 %v2979, %v2978
  %v3106 = vpack.c.b16 %v2981, %v2980
  %v3107 = vpack.c.b16 %v2983, %v2982
  %v3108 = vpack.c.b16 %v2985, %v2984
  %v3109 = vpack.c.b16 %v2987, %v2986
  %v3110 = vpack.c.b16 %v2989, %v2988
  %v3111 = vpack.c.b16 %v2991, %v2990
  %v3112 = vpack.c.b16 %v2993, %v2992
  %v3113 = vpack.c.b16 %v2995, %v2994
  %v3114 = vpack.c.b16 %v2997, %v2996
  %v3115 = vpack.c.b16 %v2999, %v2998
  %v3116 = vpack.c.b16 %v3001, %v3000
  %v3117 = vpack.c.b16 %v3003, %v3002
  %v3118 = vpack.c.b16 %v3005, %v3004
  %v3119 = vpack.c.b16 %v3007, %v3006
  %v3120 = vpack.c.b16 %v3009, %v3008
  %v3121 = vpack.c.b16 %v3011, %v3010
  %v3122 = vpack.c.b16 %v3013, %v3012
  %v3123 = vpack.c.b16 %v3015, %v3014
  %v3124 = vpack.c.b16 %v3017, %v3016
  %v3125 = vpack.c.b16 %v3019, %v3018
  %v3126 = vpack.c.b16 %v3021, %v3020
  %v3127 = vpack.c.b16 %v3023, %v3022
  %v3128 = vpack.c.b16 %v3025, %v3024
  %v3129 = vpack.c.b16 %v3027, %v3026
  %v3130 = vpack.c.b16 %v3029, %v3028
  %v3131 = vpack.c.b16 %v3031, %v3030
  %v3132 = vpack.c.b16 %v3033, %v3032
  %v3133 = vpack.c.b16 %v3035, %v3034
  %v3134 = vpack.c.b16 %v3037, %v3036
  %v3135 = vpack.c.b16 %v3039, %v3038
  %v3136 = vpack.c.b16 %v3041, %v3040
  %v3137 = vpack.c.b16 %v3043, %v3042
  %v3138 = vpack.c.b16 %v3045, %v3044
  %v3139 = vpack.c.b16 %v3047, %v3046
  %v3140 = vpack.c.b16 %v3049, %v3048
  %v3141 = vpack.c.b16 %v3051, %v3050
  %v3142 = vpack.c.b16 %v3053, %v3052
  %v3143 = vpack.c.b16 %v3055, %v3054
  %v3144 = vpack.c.b16 %v3057, %v3056
  %v3145 = vpack.c.b16 %v3059, %v3058
  %v3146 = vpack.c.b16 %v3061, %v3060
  %v3147 = vpack.c.b16 %v3063, %v3062
  %v3148 = vpack.c.b16 %v3065, %v3064
  %v3149 = vpack.c.b16 %v3067, %v3066
  %v3150 = vpack.c.b16 %v3069, %v3068
  %v3151 = vpack.c.b16 %v3071, %v3070
  %v3152 = vpack.c.b16 %v3073, %v3072
  %v3153 = vpack.c.b16 %v3075, %v3074
  %v3154 = vpack.c.b16 %v3077, %v3076
  %v3155 = vpack.c.b16 %v3079, %v3078
  %v3156 = vpack.c.b16 %v3081, %v3080
  %v3157 = vpack.c.b16 %v3083, %v3082
  %v3158 = vpack.c.b16 %v3085, %v3084
  %v3159 = vpack.c.b16 %v3087, %v3086
  %3232 = vmatpush.bf16.msra.mxu0 %v3095
  %3233 = vmatpush.bf16.msra.mxu0 %v3094
  %3234 = vmatpush.bf16.msra.mxu0 %v3093
  %3235 = vmatpush.bf16.msra.mxu0 %v3092
  %3236 = vmatpush.bf16.msra.mxu0 %v3091
  %3237 = vmatpush.bf16.msra.mxu0 %v3090
  %3238 = vmatpush.bf16.msra.mxu0 %v3089
  %3239 = vmatpush.bf16.msra.mxu0 %v3088
  %3240 = vmatmul.bf16.gmra.mxu0 %v2556
  %v3241 = vpop.f32.mrf.mxu0
  %v3242 = vadd.f32 0.0, %v3241
  %v3243 = vpop.f32.mrf.mxu0
  %v3244 = vadd.f32 0.0, %v3243
  %3245 = vmatmul.bf16.gmra.mxu0 %v2557
  %v3246 = vpop.f32.mrf.mxu0
  %v3247 = vadd.f32 0.0, %v3246
  %v3248 = vpop.f32.mrf.mxu0
  %v3249 = vadd.f32 0.0, %v3248
  %3250 = vdwg.mxu0
  %3251 = vmatpush.bf16.msra.mxu0 %v3103
  %3252 = vmatpush.bf16.msra.mxu0 %v3102
  %3253 = vmatpush.bf16.msra.mxu0 %v3101
  %3254 = vmatpush.bf16.msra.mxu0 %v3100
  %3255 = vmatpush.bf16.msra.mxu0 %v3099
  %3256 = vmatpush.bf16.msra.mxu0 %v3098
  %3257 = vmatpush.bf16.msra.mxu0 %v3097
  %3258 = vmatpush.bf16.msra.mxu0 %v3096
  %3259 = vmatmul.bf16.gmra.mxu0 %v2568
  %v3260 = vpop.f32.mrf.mxu0
  %v3261 = vadd.f32 %v3242, %v3260
  %v3262 = vpop.f32.mrf.mxu0
  %v3263 = vadd.f32 %v3244, %v3262
  %3264 = vmatmul.bf16.gmra.mxu0 %v2569
  %v3265 = vpop.f32.mrf.mxu0
  %v3266 = vadd.f32 %v3247, %v3265
  %v3267 = vpop.f32.mrf.mxu0
  %v3268 = vadd.f32 %v3249, %v3267
  %3269 = vdwg.mxu0
  %3270 = vmatpush.bf16.msra.mxu0 %v3111
  %3271 = vmatpush.bf16.msra.mxu0 %v3110
  %3272 = vmatpush.bf16.msra.mxu0 %v3109
  %3273 = vmatpush.bf16.msra.mxu0 %v3108
  %3274 = vmatpush.bf16.msra.mxu0 %v3107
  %3275 = vmatpush.bf16.msra.mxu0 %v3106
  %3276 = vmatpush.bf16.msra.mxu0 %v3105
  %3277 = vmatpush.bf16.msra.mxu0 %v3104
  %3278 = vmatmul.bf16.gmra.mxu0 %v2580
  %v3279 = vpop.f32.mrf.mxu0
  %v3280 = vadd.f32 %v3261, %v3279
  %v3281 = vpop.f32.mrf.mxu0
  %v3282 = vadd.f32 %v3263, %v3281
  %3283 = vmatmul.bf16.gmra.mxu0 %v2581
  %v3284 = vpop.f32.mrf.mxu0
  %v3285 = vadd.f32 %v3266, %v3284
  %v3286 = vpop.f32.mrf.mxu0
  %v3287 = vadd.f32 %v3268, %v3286
  %3288 = vdwg.mxu0
  %3289 = vmatpush.bf16.msra.mxu0 %v3119
  %3290 = vmatpush.bf16.msra.mxu0 %v3118
  %3291 = vmatpush.bf16.msra.mxu0 %v3117
  %3292 = vmatpush.bf16.msra.mxu0 %v3116
  %3293 = vmatpush.bf16.msra.mxu0 %v3115
  %3294 = vmatpush.bf16.msra.mxu0 %v3114
  %3295 = vmatpush.bf16.msra.mxu0 %v3113
  %3296 = vmatpush.bf16.msra.mxu0 %v3112
  %3297 = vmatmul.bf16.gmra.mxu0 %v2592
  %v3298 = vpop.f32.mrf.mxu0
  %v3299 = vadd.f32 %v3280, %v3298
  %v3300 = vpop.f32.mrf.mxu0
  %v3301 = vadd.f32 %v3282, %v3300
  %3302 = vmatmul.bf16.gmra.mxu0 %v2593
  %v3303 = vpop.f32.mrf.mxu0
  %v3304 = vadd.f32 %v3285, %v3303
  %v3305 = vpop.f32.mrf.mxu0
  %v3306 = vadd.f32 %v3287, %v3305
  %3307 = vdwg.mxu0
  %3308 = vmatpush.bf16.msra.mxu0 %v3127
  %3309 = vmatpush.bf16.msra.mxu0 %v3126
  %3310 = vmatpush.bf16.msra.mxu0 %v3125
  %3311 = vmatpush.bf16.msra.mxu0 %v3124
  %3312 = vmatpush.bf16.msra.mxu0 %v3123
  %3313 = vmatpush.bf16.msra.mxu0 %v3122
  %3314 = vmatpush.bf16.msra.mxu0 %v3121
  %3315 = vmatpush.bf16.msra.mxu0 %v3120
  %3316 = vmatmul.bf16.gmra.mxu0 %v2604
  %v3317 = vpop.f32.mrf.mxu0
  %v3318 = vadd.f32 %v3299, %v3317
  %v3319 = vpop.f32.mrf.mxu0
  %v3320 = vadd.f32 %v3301, %v3319
  %3321 = vmatmul.bf16.gmra.mxu0 %v2605
  %v3322 = vpop.f32.mrf.mxu0
  %v3323 = vadd.f32 %v3304, %v3322
  %v3324 = vpop.f32.mrf.mxu0
  %v3325 = vadd.f32 %v3306, %v3324
  %3326 = vdwg.mxu0
  %3327 = vmatpush.bf16.msra.mxu0 %v3135
  %3328 = vmatpush.bf16.msra.mxu0 %v3134
  %3329 = vmatpush.bf16.msra.mxu0 %v3133
  %3330 = vmatpush.bf16.msra.mxu0 %v3132
  %3331 = vmatpush.bf16.msra.mxu0 %v3131
  %3332 = vmatpush.bf16.msra.mxu0 %v3130
  %3333 = vmatpush.bf16.msra.mxu0 %v3129
  %3334 = vmatpush.bf16.msra.mxu0 %v3128
  %3335 = vmatmul.bf16.gmra.mxu0 %v2616
  %v3336 = vpop.f32.mrf.mxu0
  %v3337 = vadd.f32 %v3318, %v3336
  %v3338 = vpop.f32.mrf.mxu0
  %v3339 = vadd.f32 %v3320, %v3338
  %3340 = vmatmul.bf16.gmra.mxu0 %v2617
  %v3341 = vpop.f32.mrf.mxu0
  %v3342 = vadd.f32 %v3323, %v3341
  %v3343 = vpop.f32.mrf.mxu0
  %v3344 = vadd.f32 %v3325, %v3343
  %3345 = vdwg.mxu0
  %3346 = vmatpush.bf16.msra.mxu0 %v3143
  %3347 = vmatpush.bf16.msra.mxu0 %v3142
  %3348 = vmatpush.bf16.msra.mxu0 %v3141
  %3349 = vmatpush.bf16.msra.mxu0 %v3140
  %3350 = vmatpush.bf16.msra.mxu0 %v3139
  %3351 = vmatpush.bf16.msra.mxu0 %v3138
  %3352 = vmatpush.bf16.msra.mxu0 %v3137
  %3353 = vmatpush.bf16.msra.mxu0 %v3136
  %3354 = vmatmul.bf16.gmra.mxu0 %v2628
  %v3355 = vpop.f32.mrf.mxu0
  %v3356 = vadd.f32 %v3337, %v3355
  %v3357 = vpop.f32.mrf.mxu0
  %v3358 = vadd.f32 %v3339, %v3357
  %3359 = vmatmul.bf16.gmra.mxu0 %v2629
  %v3360 = vpop.f32.mrf.mxu0
  %v3361 = vadd.f32 %v3342, %v3360
  %v3362 = vpop.f32.mrf.mxu0
  %v3363 = vadd.f32 %v3344, %v3362
  %3364 = vdwg.mxu0
  %3365 = vmatpush.bf16.msra.mxu0 %v3151
  %3366 = vmatpush.bf16.msra.mxu0 %v3150
  %3367 = vmatpush.bf16.msra.mxu0 %v3149
  %3368 = vmatpush.bf16.msra.mxu0 %v3148
  %3369 = vmatpush.bf16.msra.mxu0 %v3147
  %3370 = vmatpush.bf16.msra.mxu0 %v3146
  %3371 = vmatpush.bf16.msra.mxu0 %v3145
  %3372 = vmatpush.bf16.msra.mxu0 %v3144
  %3373 = vmatmul.bf16.gmra.mxu0 %v2640
  %v3374 = vpop.f32.mrf.mxu0
  %v3375 = vadd.f32 %v3356, %v3374
  %v3376 = vpop.f32.mrf.mxu0
  %v3377 = vadd.f32 %v3358, %v3376
  %3378 = vmatmul.bf16.gmra.mxu0 %v2641
  %v3379 = vpop.f32.mrf.mxu0
  %v3380 = vadd.f32 %v3361, %v3379
  %v3381 = vpop.f32.mrf.mxu0
  %v3382 = vadd.f32 %v3363, %v3381
  %3383 = vdwg.mxu0
  %3384 = vmatpush.bf16.msra.mxu0 %v3159
  %3385 = vmatpush.bf16.msra.mxu0 %v3158
  %3386 = vmatpush.bf16.msra.mxu0 %v3157
  %3387 = vmatpush.bf16.msra.mxu0 %v3156
  %3388 = vmatpush.bf16.msra.mxu0 %v3155
  %3389 = vmatpush.bf16.msra.mxu0 %v3154
  %3390 = vmatpush.bf16.msra.mxu0 %v3153
  %3391 = vmatpush.bf16.msra.mxu0 %v3152
  %3392 = vmatmul.bf16.gmra.mxu0 %v2652
  %v3393 = vpop.f32.mrf.mxu0
  %v3394 = vadd.f32 %v3375, %v3393
  %v3395 = vpop.f32.mrf.mxu0
  %v3396 = vadd.f32 %v3377, %v3395
  %3397 = vmatmul.bf16.gmra.mxu0 %v2653
  %v3398 = vpop.f32.mrf.mxu0
  %v3399 = vadd.f32 %v3380, %v3398
  %v3400 = vpop.f32.mrf.mxu0
  %v3401 = vadd.f32 %v3382, %v3400
  %3402 = vdwg.mxu0
  %v3403 = vmax.f32 %v3394, %v3396
  %v3404 = vmax.f32 %v3399, %v3401
  %v3405 = vmax.f32 %v3403, %v3404
  %s3406 = scalar_lea.vmem %s6, 2
  %v3407 = vld [vmem:[%s3406] sm:$0x1]
  %v3409 = vperm.slane %v3407, 0
  %v3411 = vadd.f32 %v3405, %v3409
  %v3412 = vmax.f32 %v3411, 0.0
  %3413 = vst [vmem:[%s7] sm:$0xff] %v3412
  // Predicated region
  $region30: #{cnn_forward.1} parent=0 // pred_check
    _
  $region31: #{cnn_forward.1} parent=0 // pred_check_branch
    %3415 = sbr.rel (0) target = $region33
  $region32: #{cnn_forward.1} parent=0 // pred_region
    _
  $region33: #{cnn_forward.1} parent=0 // pred_fallthru
    _
  // Predicated region
  $region34: #{cnn_forward.1} parent=0 // pred_check
    _
  $region35: #{cnn_forward.1} parent=0 // pred_check_branch
    %3417 = sbr.rel (0) target = $region37
  $region36: #{cnn_forward.1} parent=0 // pred_region
    _
  $region37: #{cnn_forward.1} parent=0 // pred_fallthru
    _

</llo_original>
